<compile_context>
chip_gen: v7x
topology: tpu7x:2x2x1
jax: 0.10.0
libtpu: 0.0.40
codegen_flags: <defaults>
</compile_context>

<pallas_src>
import functools

import jax
import jax.numpy as jnp
import numpy as np
from jax import lax
from jax.experimental import pallas as pl
from jax.experimental.pallas import tpu as pltpu

EPS = 1e-5


def _ru8(n):
    return ((n + 7) // 8) * 8


def _model_kernel(L, Bt, D, H, K, xpad_ref, wg_ref, wd_ref, out_ref):
    pad = (K - 1) // 2
    f32 = jnp.float32
    R = L * Bt

    # ---- unpack resident, sublane-aligned weight slabs (static slices) ----
    o_whh = _ru8(D)
    o_bg = o_whh + _ru8(H)
    wih = wg_ref[0:D, :]                        # (D, 4H) input->gate weights (i,f,g,o)
    whh = wg_ref[o_whh:o_whh + H, :]            # (H, 4H) recurrent weights, fused gates
    bg = wg_ref[o_bg:o_bg + 1, :]               # (1, 4H) combined LSTM bias (b_ih + b_hh)

    o_blin = _ru8(D)
    o_bp = o_blin + 8
    o_wproj = o_bp + 8
    wlin = wd_ref[0:D, :]                       # (D, D)  Linear_compartment weight
    blin = wd_ref[o_blin:o_blin + 1, :]         # (1, D)
    bp = wd_ref[o_bp:o_bp + 1, :]               # (1, D)  LSTM output-projection bias
    wproj = wd_ref[o_wproj:o_wproj + H, :]      # (H, D)

    xpad = xpad_ref[...]                        # (Lp*Bt, D) time-major, replicate-padded
    x = xpad[pad * Bt:pad * Bt + R, :]          # (R, D) original series (single DMA)

    # ---- series decomposition: moving average over the time axis ----
    trend = xpad[0:R, :]
    for j in range(1, K):                       # small static unrolled loop
        trend = trend + xpad[j * Bt:j * Bt + R, :]
    trend = trend * (1.0 / K)
    freq = x - trend                            # seasonal / high-frequency part

    # ---- RevIN activate: per-(batch,feature) stats over the L time rows ----
    acc = trend[0:Bt, :]
    for t in range(1, L):
        acc = acc + trend[t * Bt:(t + 1) * Bt, :]
    mean_bd = acc * (1.0 / L)                                   # (Bt, D)
    d0 = trend[0:Bt, :] - mean_bd
    acc2 = d0 * d0
    for t in range(1, L):
        d_t = trend[t * Bt:(t + 1) * Bt, :] - mean_bd
        acc2 = acc2 + d_t * d_t
    var_bd = acc2 * (1.0 / L)
    inv_bd = lax.rsqrt(var_bd + EPS)                            # EUP rsqrt
    std_bd = jnp.sqrt(var_bd + EPS)
    # broadcast the (Bt, D) stats back over the L time rows (t-major layout)
    mean = jnp.concatenate([mean_bd] * L, axis=0)               # (R, D)
    inv_std = jnp.concatenate([inv_bd] * L, axis=0)
    stdev = jnp.concatenate([std_bd] * L, axis=0)

    tnorm = (trend - mean) * inv_std

    # ---- Linear compartment (one MXU call on the whole tile) + RevIN deactivate ----
    xt = jnp.dot(tnorm, wlin, preferred_element_type=f32) + blin   # (R, D)
    xt = xt * stdev + mean

    # ---- LSTM compartment on freq, batched over the Bt rows ----
    # input-side gate contributions for every (t, b) in ONE MXU call
    gin = jnp.dot(freq, wih, preferred_element_type=f32) + bg      # (R, 4H)

    h = jnp.zeros((Bt, H), f32)
    c = jnp.zeros((Bt, H), f32)
    hs = []
    for t in range(L):                        # static unroll; h/c stay in vregs
        g = gin[t * Bt:(t + 1) * Bt, :] + jnp.dot(
            h, whh, preferred_element_type=f32)                    # one fused MXU push
        i_g = jax.nn.sigmoid(g[:, 0 * H:1 * H])
        f_g = jax.nn.sigmoid(g[:, 1 * H:2 * H])
        g_g = jnp.tanh(g[:, 2 * H:3 * H])
        o_g = jax.nn.sigmoid(g[:, 3 * H:4 * H])
        c = f_g * c + i_g * g_g
        h = o_g * jnp.tanh(c)
        hs.append(h)
    hseq = jnp.concatenate(hs, axis=0)                             # (R, H), t-major
    x_freq = jnp.dot(hseq, wproj, preferred_element_type=f32) + bp  # (R, D)

    # ---- residual recombination (exactly as written in the PyTorch forward) ----
    s = xt + x_freq
    res = x - s
    out_ref[...] = (s + res).astype(out_ref.dtype)


def _pack_params(params, D, H):
    """Pack the 7 tiny weight/bias arrays into two lane-aligned VMEM slabs."""
    wlin, blin, wih, whh, bg, wproj, bp = params
    # gate-side slab (lanes = 4H)
    o_whh = _ru8(D)
    o_bg = o_whh + _ru8(H)
    rows_g = _ru8(o_bg + 1)
    wg = jnp.zeros((rows_g, 4 * H), jnp.float32)
    wg = wg.at[0:D].set(wih)
    wg = wg.at[o_whh:o_whh + H].set(whh)
    wg = wg.at[o_bg:o_bg + 1].set(bg)
    # feature-side slab (lanes = D)
    o_blin = _ru8(D)
    o_bp = o_blin + 8
    o_wproj = o_bp + 8
    rows_d = _ru8(o_wproj + H)
    wd = jnp.zeros((rows_d, D), jnp.float32)
    wd = wd.at[0:D].set(wlin)
    wd = wd.at[o_blin:o_blin + 1].set(blin)
    wd = wd.at[o_bp:o_bp + 1].set(bp)
    wd = wd.at[o_wproj:o_wproj + H].set(wproj)
    return wg, wd


def model_forward(x, params, *, kernel_size=5, hid_dim=32, batch_tile=None):
    B, L, D = x.shape
    K = kernel_size
    H = hid_dim
    assert K % 2 == 1, "series_decomp replicate padding assumes an odd kernel_size"
    Bt = B if batch_tile is None else int(batch_tile)
    assert 1 <= Bt <= B and B % Bt == 0
    nb = B // Bt
    pad = (K - 1) // 2
    Lp = L + 2 * pad

    # replicate padding + relayout to time-major batch tiles (wrapper-side XLA)
    front = jnp.repeat(x[:, :1, :], pad, axis=1)
    end = jnp.repeat(x[:, -1:, :], pad, axis=1)
    xpad = jnp.concatenate([front, x, end], axis=1)                # (B, Lp, D)
    xflat = (xpad.reshape(nb, Bt, Lp, D)
             .transpose(0, 2, 1, 3)                                # (nb, Lp, Bt, D)
             .reshape(nb, Lp * Bt, D))

    wg, wd = _pack_params(params, D, H)
    kernel = functools.partial(_model_kernel, L, Bt, D, H, K)

    if nb == 1:
        # whole batch in a single invocation: no grid, no per-step overhead
        yflat = pl.pallas_call(
            kernel,
            out_shape=jax.ShapeDtypeStruct((L * Bt, D), jnp.float32),
            in_specs=[pl.BlockSpec((Lp * Bt, D), lambda: (0, 0)),
                      pl.BlockSpec(wg.shape, lambda: (0, 0)),
                      pl.BlockSpec(wd.shape, lambda: (0, 0))],
            out_specs=pl.BlockSpec((L * Bt, D), lambda: (0, 0)),
        )(xflat[0], wg, wd)[None]
    else:
        # batch-tiled parallel grid (>=2 blocks -> both TensorCores on v7x)
        yflat = pl.pallas_call(
            kernel,
            out_shape=jax.ShapeDtypeStruct((nb, L * Bt, D), jnp.float32),
            grid=(nb,),
            in_specs=[pl.BlockSpec((None, Lp * Bt, D), lambda i: (i, 0, 0)),
                      pl.BlockSpec(wg.shape, lambda i: (0, 0)),
                      pl.BlockSpec(wd.shape, lambda i: (0, 0))],
            out_specs=pl.BlockSpec((None, L * Bt, D), lambda i: (i, 0, 0)),
            compiler_params=pltpu.CompilerParams(
                dimension_semantics=("parallel",)),
        )(xflat, wg, wd)

    return (yflat.reshape(nb, L, Bt, D)
            .transpose(0, 2, 1, 3)
            .reshape(B, L, D))


def init_params(key, D, H):
    ks = jax.random.split(key, 7)
    s = 0.1
    wlin = jax.random.normal(ks[0], (D, D), jnp.float32) * s       # Linear_compartment
    blin = jax.random.normal(ks[1], (1, D), jnp.float32) * s
    wih = jax.random.normal(ks[2], (D, 4 * H), jnp.float32) * s    # LSTM input weights (i,f,g,o)
    whh = jax.random.normal(ks[3], (H, 4 * H), jnp.float32) * s    # LSTM recurrent weights
    bg = jax.random.normal(ks[4], (1, 4 * H), jnp.float32) * s     # combined LSTM bias (b_ih+b_hh)
    wproj = jax.random.normal(ks[5], (H, D), jnp.float32) * s      # LSTM output projection
    bp = jax.random.normal(ks[6], (1, D), jnp.float32) * s
    return (wlin, blin, wih, whh, bg, wproj, bp)


if __name__ == "__main__":
    # configs: batch_size=2, input_seq=pred_seq=8, input_dim=output_dim=4,
    #          hid_dim=32, moving_avg=5, dropout (eval-mode identity)
    B, L, D, H, K = 2, 8, 4, 32, 5

    key = jax.random.PRNGKey(0)
    kx, kp = jax.random.split(key)
    x = jax.random.normal(kx, (B, L, D), dtype=jnp.float32)
    params = init_params(kp, D, H)

    # default path: whole batch, grid=() (best for v5e/v6e single-TC chips)
    out = jax.block_until_ready(model_forward(x, params, kernel_size=K, hid_dim=H))
    assert out.shape == (B, L, D)
    assert bool(jnp.all(jnp.isfinite(out)))
    # out = (x_trend + x_freq) + (x - (x_trend + x_freq)) == x up to fp rounding
    np.testing.assert_allclose(np.asarray(out), np.asarray(x), atol=1e-3)

    # batch-tiled parallel-grid path (v7x two-TC style); must match the fused path
    out2 = jax.block_until_ready(
        model_forward(x, params, kernel_size=K, hid_dim=H, batch_tile=1))
    np.testing.assert_allclose(np.asarray(out2), np.asarray(out), atol=1e-4)

    print("KERNEL_OK")
</pallas_src>

<mosaic_0001>
module attributes {stable_mosaic.version = 11 : i64} {
  func.func @_model_kernel(%arg0: memref<24x4xf32, #tpu.memory_space<vmem>>, %arg1: memref<48x128xf32, #tpu.memory_space<vmem>>, %arg2: memref<56x4xf32, #tpu.memory_space<vmem>>, %arg3: memref<16x4xf32, #tpu.memory_space<vmem>>) attributes {dimension_semantics = [], scalar_prefetch = 0 : i64, scratch_operands = 0 : i64, tpu.core_type = #tpu.core_type<tc>} {
    %c0 = arith.constant 0 : index
    %c0_0 = arith.constant 0 : index
    %0 = vector.load %arg1[%c0, %c0_0] : memref<48x128xf32, #tpu.memory_space<vmem>>, vector<4x128xf32>
    %c8 = arith.constant 8 : index
    %c0_1 = arith.constant 0 : index
    %1 = vector.load %arg1[%c8, %c0_1] : memref<48x128xf32, #tpu.memory_space<vmem>>, vector<32x128xf32>
    %c40 = arith.constant 40 : index
    %c0_2 = arith.constant 0 : index
    %2 = vector.load %arg1[%c40, %c0_2] : memref<48x128xf32, #tpu.memory_space<vmem>>, vector<1x128xf32>
    %c0_3 = arith.constant 0 : index
    %c0_4 = arith.constant 0 : index
    %3 = vector.load %arg2[%c0_3, %c0_4] : memref<56x4xf32, #tpu.memory_space<vmem>>, vector<4x4xf32>
    %c8_5 = arith.constant 8 : index
    %c0_6 = arith.constant 0 : index
    %4 = vector.load %arg2[%c8_5, %c0_6] : memref<56x4xf32, #tpu.memory_space<vmem>>, vector<1x4xf32>
    %c16 = arith.constant 16 : index
    %c0_7 = arith.constant 0 : index
    %5 = vector.load %arg2[%c16, %c0_7] : memref<56x4xf32, #tpu.memory_space<vmem>>, vector<1x4xf32>
    %c24 = arith.constant 24 : index
    %c0_8 = arith.constant 0 : index
    %6 = vector.load %arg2[%c24, %c0_8] : memref<56x4xf32, #tpu.memory_space<vmem>>, vector<32x4xf32>
    %c0_9 = arith.constant 0 : index
    %c0_10 = arith.constant 0 : index
    %7 = vector.load %arg0[%c0_9, %c0_10] : memref<24x4xf32, #tpu.memory_space<vmem>>, vector<24x4xf32>
    %8 = vector.extract_strided_slice %7 {offsets = [4, 0], sizes = [16, 4], strides = [1, 1]} : vector<24x4xf32> to vector<16x4xf32>
    %9 = vector.extract_strided_slice %7 {offsets = [0, 0], sizes = [16, 4], strides = [1, 1]} : vector<24x4xf32> to vector<16x4xf32>
    %10 = vector.extract_strided_slice %7 {offsets = [2, 0], sizes = [16, 4], strides = [1, 1]} : vector<24x4xf32> to vector<16x4xf32>
    %11 = arith.addf %9, %10 : vector<16x4xf32>
    %12 = vector.extract_strided_slice %7 {offsets = [4, 0], sizes = [16, 4], strides = [1, 1]} : vector<24x4xf32> to vector<16x4xf32>
    %13 = arith.addf %11, %12 : vector<16x4xf32>
    %14 = vector.extract_strided_slice %7 {offsets = [6, 0], sizes = [16, 4], strides = [1, 1]} : vector<24x4xf32> to vector<16x4xf32>
    %15 = arith.addf %13, %14 : vector<16x4xf32>
    %16 = vector.extract_strided_slice %7 {offsets = [8, 0], sizes = [16, 4], strides = [1, 1]} : vector<24x4xf32> to vector<16x4xf32>
    %17 = arith.addf %15, %16 : vector<16x4xf32>
    %cst = arith.constant 2.000000e-01 : f32
    %18 = vector.broadcast %cst : f32 to vector<16x4xf32>
    %19 = arith.mulf %17, %18 : vector<16x4xf32>
    %20 = arith.subf %8, %19 : vector<16x4xf32>
    %21 = vector.extract_strided_slice %19 {offsets = [0, 0], sizes = [2, 4], strides = [1, 1]} : vector<16x4xf32> to vector<2x4xf32>
    %22 = vector.extract_strided_slice %19 {offsets = [2, 0], sizes = [2, 4], strides = [1, 1]} : vector<16x4xf32> to vector<2x4xf32>
    %23 = arith.addf %21, %22 : vector<2x4xf32>
    %24 = vector.extract_strided_slice %19 {offsets = [4, 0], sizes = [2, 4], strides = [1, 1]} : vector<16x4xf32> to vector<2x4xf32>
    %25 = arith.addf %23, %24 : vector<2x4xf32>
    %26 = vector.extract_strided_slice %19 {offsets = [6, 0], sizes = [2, 4], strides = [1, 1]} : vector<16x4xf32> to vector<2x4xf32>
    %27 = arith.addf %25, %26 : vector<2x4xf32>
    %28 = vector.extract_strided_slice %19 {offsets = [8, 0], sizes = [2, 4], strides = [1, 1]} : vector<16x4xf32> to vector<2x4xf32>
    %29 = arith.addf %27, %28 : vector<2x4xf32>
    %30 = vector.extract_strided_slice %19 {offsets = [10, 0], sizes = [2, 4], strides = [1, 1]} : vector<16x4xf32> to vector<2x4xf32>
    %31 = arith.addf %29, %30 : vector<2x4xf32>
    %32 = vector.extract_strided_slice %19 {offsets = [12, 0], sizes = [2, 4], strides = [1, 1]} : vector<16x4xf32> to vector<2x4xf32>
    %33 = arith.addf %31, %32 : vector<2x4xf32>
    %34 = vector.extract_strided_slice %19 {offsets = [14, 0], sizes = [2, 4], strides = [1, 1]} : vector<16x4xf32> to vector<2x4xf32>
    %35 = arith.addf %33, %34 : vector<2x4xf32>
    %cst_11 = arith.constant 1.250000e-01 : f32
    %36 = vector.broadcast %cst_11 : f32 to vector<2x4xf32>
    %37 = arith.mulf %35, %36 : vector<2x4xf32>
    %38 = vector.extract_strided_slice %19 {offsets = [0, 0], sizes = [2, 4], strides = [1, 1]} : vector<16x4xf32> to vector<2x4xf32>
    %39 = arith.subf %38, %37 : vector<2x4xf32>
    %40 = arith.mulf %39, %39 : vector<2x4xf32>
    %41 = vector.extract_strided_slice %19 {offsets = [2, 0], sizes = [2, 4], strides = [1, 1]} : vector<16x4xf32> to vector<2x4xf32>
    %42 = arith.subf %41, %37 : vector<2x4xf32>
    %43 = arith.mulf %42, %42 : vector<2x4xf32>
    %44 = arith.addf %40, %43 : vector<2x4xf32>
    %45 = vector.extract_strided_slice %19 {offsets = [4, 0], sizes = [2, 4], strides = [1, 1]} : vector<16x4xf32> to vector<2x4xf32>
    %46 = arith.subf %45, %37 : vector<2x4xf32>
    %47 = arith.mulf %46, %46 : vector<2x4xf32>
    %48 = arith.addf %44, %47 : vector<2x4xf32>
    %49 = vector.extract_strided_slice %19 {offsets = [6, 0], sizes = [2, 4], strides = [1, 1]} : vector<16x4xf32> to vector<2x4xf32>
    %50 = arith.subf %49, %37 : vector<2x4xf32>
    %51 = arith.mulf %50, %50 : vector<2x4xf32>
    %52 = arith.addf %48, %51 : vector<2x4xf32>
    %53 = vector.extract_strided_slice %19 {offsets = [8, 0], sizes = [2, 4], strides = [1, 1]} : vector<16x4xf32> to vector<2x4xf32>
    %54 = arith.subf %53, %37 : vector<2x4xf32>
    %55 = arith.mulf %54, %54 : vector<2x4xf32>
    %56 = arith.addf %52, %55 : vector<2x4xf32>
    %57 = vector.extract_strided_slice %19 {offsets = [10, 0], sizes = [2, 4], strides = [1, 1]} : vector<16x4xf32> to vector<2x4xf32>
    %58 = arith.subf %57, %37 : vector<2x4xf32>
    %59 = arith.mulf %58, %58 : vector<2x4xf32>
    %60 = arith.addf %56, %59 : vector<2x4xf32>
    %61 = vector.extract_strided_slice %19 {offsets = [12, 0], sizes = [2, 4], strides = [1, 1]} : vector<16x4xf32> to vector<2x4xf32>
    %62 = arith.subf %61, %37 : vector<2x4xf32>
    %63 = arith.mulf %62, %62 : vector<2x4xf32>
    %64 = arith.addf %60, %63 : vector<2x4xf32>
    %65 = vector.extract_strided_slice %19 {offsets = [14, 0], sizes = [2, 4], strides = [1, 1]} : vector<16x4xf32> to vector<2x4xf32>
    %66 = arith.subf %65, %37 : vector<2x4xf32>
    %67 = arith.mulf %66, %66 : vector<2x4xf32>
    %68 = arith.addf %64, %67 : vector<2x4xf32>
    %cst_12 = arith.constant 1.250000e-01 : f32
    %69 = vector.broadcast %cst_12 : f32 to vector<2x4xf32>
    %70 = arith.mulf %68, %69 : vector<2x4xf32>
    %cst_13 = arith.constant 9.99999974E-6 : f32
    %71 = vector.broadcast %cst_13 : f32 to vector<2x4xf32>
    %72 = arith.addf %70, %71 : vector<2x4xf32>
    %73 = math.rsqrt %72 : vector<2x4xf32>
    %cst_14 = arith.constant 9.99999974E-6 : f32
    %74 = vector.broadcast %cst_14 : f32 to vector<2x4xf32>
    %75 = arith.addf %70, %74 : vector<2x4xf32>
    %76 = math.sqrt %75 : vector<2x4xf32>
    %77 = tpu.concatenate %37, %37, %37, %37, %37, %37, %37, %37 in 0 : vector<2x4xf32>, vector<2x4xf32>, vector<2x4xf32>, vector<2x4xf32>, vector<2x4xf32>, vector<2x4xf32>, vector<2x4xf32>, vector<2x4xf32> -> vector<16x4xf32>
    %78 = tpu.concatenate %73, %73, %73, %73, %73, %73, %73, %73 in 0 : vector<2x4xf32>, vector<2x4xf32>, vector<2x4xf32>, vector<2x4xf32>, vector<2x4xf32>, vector<2x4xf32>, vector<2x4xf32>, vector<2x4xf32> -> vector<16x4xf32>
    %79 = tpu.concatenate %76, %76, %76, %76, %76, %76, %76, %76 in 0 : vector<2x4xf32>, vector<2x4xf32>, vector<2x4xf32>, vector<2x4xf32>, vector<2x4xf32>, vector<2x4xf32>, vector<2x4xf32>, vector<2x4xf32> -> vector<16x4xf32>
    %80 = arith.subf %19, %77 : vector<16x4xf32>
    %81 = arith.mulf %80, %78 : vector<16x4xf32>
    %cst_15 = arith.constant dense<0.000000e+00> : vector<16x4xf32>
    %82 = tpu.matmul %81, %3, %cst_15 {dimension_numbers = #tpu.dot_dimension_numbers<[1], [0], [0], [1], [0, 0, 1, 1], [], []>} : vector<16x4xf32>, vector<4x4xf32>, vector<16x4xf32> -> vector<16x4xf32>
    %83 = vector.broadcast %4 : vector<1x4xf32> to vector<16x4xf32>
    %84 = arith.addf %82, %83 : vector<16x4xf32>
    %85 = arith.mulf %84, %79 : vector<16x4xf32>
    %86 = arith.addf %85, %77 : vector<16x4xf32>
    %cst_16 = arith.constant dense<0.000000e+00> : vector<16x128xf32>
    %87 = tpu.matmul %20, %0, %cst_16 {dimension_numbers = #tpu.dot_dimension_numbers<[1], [0], [0], [1], [0, 0, 1, 1], [], []>} : vector<16x4xf32>, vector<4x128xf32>, vector<16x128xf32> -> vector<16x128xf32>
    %88 = vector.broadcast %2 : vector<1x128xf32> to vector<16x128xf32>
    %89 = arith.addf %87, %88 : vector<16x128xf32>
    %cst_17 = arith.constant 0.000000e+00 : f32
    %90 = vector.broadcast %cst_17 : f32 to vector<2x32xf32>
    %cst_18 = arith.constant 0.000000e+00 : f32
    %91 = vector.broadcast %cst_18 : f32 to vector<2x32xf32>
    %92 = vector.extract_strided_slice %89 {offsets = [0, 0], sizes = [2, 128], strides = [1, 1]} : vector<16x128xf32> to vector<2x128xf32>
    %cst_19 = arith.constant dense<0.000000e+00> : vector<2x128xf32>
    %93 = tpu.matmul %90, %1, %cst_19 {dimension_numbers = #tpu.dot_dimension_numbers<[1], [0], [0], [1], [0, 0, 1, 1], [], []>} : vector<2x32xf32>, vector<32x128xf32>, vector<2x128xf32> -> vector<2x128xf32>
    %94 = arith.addf %92, %93 : vector<2x128xf32>
    %95 = vector.extract_strided_slice %94 {offsets = [0, 0], sizes = [2, 32], strides = [1, 1]} : vector<2x128xf32> to vector<2x32xf32>
    %96 = arith.negf %95 : vector<2x32xf32>
    %97 = math.exp %96 : vector<2x32xf32>
    %cst_20 = arith.constant 1.000000e+00 : f32
    %98 = vector.broadcast %cst_20 : f32 to vector<2x32xf32>
    %99 = arith.addf %98, %97 : vector<2x32xf32>
    %100 = arith.divf %98, %99 : vector<2x32xf32>
    %101 = vector.extract_strided_slice %94 {offsets = [0, 32], sizes = [2, 32], strides = [1, 1]} : vector<2x128xf32> to vector<2x32xf32>
    %102 = arith.negf %101 : vector<2x32xf32>
    %103 = math.exp %102 : vector<2x32xf32>
    %cst_21 = arith.constant 1.000000e+00 : f32
    %104 = vector.broadcast %cst_21 : f32 to vector<2x32xf32>
    %105 = arith.addf %104, %103 : vector<2x32xf32>
    %106 = arith.divf %104, %105 : vector<2x32xf32>
    %107 = vector.extract_strided_slice %94 {offsets = [0, 64], sizes = [2, 32], strides = [1, 1]} : vector<2x128xf32> to vector<2x32xf32>
    %108 = math.tanh %107 : vector<2x32xf32>
    %109 = vector.extract_strided_slice %94 {offsets = [0, 96], sizes = [2, 32], strides = [1, 1]} : vector<2x128xf32> to vector<2x32xf32>
    %110 = arith.negf %109 : vector<2x32xf32>
    %111 = math.exp %110 : vector<2x32xf32>
    %cst_22 = arith.constant 1.000000e+00 : f32
    %112 = vector.broadcast %cst_22 : f32 to vector<2x32xf32>
    %113 = arith.addf %112, %111 : vector<2x32xf32>
    %114 = arith.divf %112, %113 : vector<2x32xf32>
    %115 = arith.mulf %106, %91 : vector<2x32xf32>
    %116 = arith.mulf %100, %108 : vector<2x32xf32>
    %117 = arith.addf %115, %116 : vector<2x32xf32>
    %118 = math.tanh %117 : vector<2x32xf32>
    %119 = arith.mulf %114, %118 : vector<2x32xf32>
    %120 = vector.extract_strided_slice %89 {offsets = [2, 0], sizes = [2, 128], strides = [1, 1]} : vector<16x128xf32> to vector<2x128xf32>
    %cst_23 = arith.constant dense<0.000000e+00> : vector<2x128xf32>
    %121 = tpu.matmul %119, %1, %cst_23 {dimension_numbers = #tpu.dot_dimension_numbers<[1], [0], [0], [1], [0, 0, 1, 1], [], []>} : vector<2x32xf32>, vector<32x128xf32>, vector<2x128xf32> -> vector<2x128xf32>
    %122 = arith.addf %120, %121 : vector<2x128xf32>
    %123 = vector.extract_strided_slice %122 {offsets = [0, 0], sizes = [2, 32], strides = [1, 1]} : vector<2x128xf32> to vector<2x32xf32>
    %124 = arith.negf %123 : vector<2x32xf32>
    %125 = math.exp %124 : vector<2x32xf32>
    %cst_24 = arith.constant 1.000000e+00 : f32
    %126 = vector.broadcast %cst_24 : f32 to vector<2x32xf32>
    %127 = arith.addf %126, %125 : vector<2x32xf32>
    %128 = arith.divf %126, %127 : vector<2x32xf32>
    %129 = vector.extract_strided_slice %122 {offsets = [0, 32], sizes = [2, 32], strides = [1, 1]} : vector<2x128xf32> to vector<2x32xf32>
    %130 = arith.negf %129 : vector<2x32xf32>
    %131 = math.exp %130 : vector<2x32xf32>
    %cst_25 = arith.constant 1.000000e+00 : f32
    %132 = vector.broadcast %cst_25 : f32 to vector<2x32xf32>
    %133 = arith.addf %132, %131 : vector<2x32xf32>
    %134 = arith.divf %132, %133 : vector<2x32xf32>
    %135 = vector.extract_strided_slice %122 {offsets = [0, 64], sizes = [2, 32], strides = [1, 1]} : vector<2x128xf32> to vector<2x32xf32>
    %136 = math.tanh %135 : vector<2x32xf32>
    %137 = vector.extract_strided_slice %122 {offsets = [0, 96], sizes = [2, 32], strides = [1, 1]} : vector<2x128xf32> to vector<2x32xf32>
    %138 = arith.negf %137 : vector<2x32xf32>
    %139 = math.exp %138 : vector<2x32xf32>
    %cst_26 = arith.constant 1.000000e+00 : f32
    %140 = vector.broadcast %cst_26 : f32 to vector<2x32xf32>
    %141 = arith.addf %140, %139 : vector<2x32xf32>
    %142 = arith.divf %140, %141 : vector<2x32xf32>
    %143 = arith.mulf %134, %117 : vector<2x32xf32>
    %144 = arith.mulf %128, %136 : vector<2x32xf32>
    %145 = arith.addf %143, %144 : vector<2x32xf32>
    %146 = math.tanh %145 : vector<2x32xf32>
    %147 = arith.mulf %142, %146 : vector<2x32xf32>
    %148 = vector.extract_strided_slice %89 {offsets = [4, 0], sizes = [2, 128], strides = [1, 1]} : vector<16x128xf32> to vector<2x128xf32>
    %cst_27 = arith.constant dense<0.000000e+00> : vector<2x128xf32>
    %149 = tpu.matmul %147, %1, %cst_27 {dimension_numbers = #tpu.dot_dimension_numbers<[1], [0], [0], [1], [0, 0, 1, 1], [], []>} : vector<2x32xf32>, vector<32x128xf32>, vector<2x128xf32> -> vector<2x128xf32>
    %150 = arith.addf %148, %149 : vector<2x128xf32>
    %151 = vector.extract_strided_slice %150 {offsets = [0, 0], sizes = [2, 32], strides = [1, 1]} : vector<2x128xf32> to vector<2x32xf32>
    %152 = arith.negf %151 : vector<2x32xf32>
    %153 = math.exp %152 : vector<2x32xf32>
    %cst_28 = arith.constant 1.000000e+00 : f32
    %154 = vector.broadcast %cst_28 : f32 to vector<2x32xf32>
    %155 = arith.addf %154, %153 : vector<2x32xf32>
    %156 = arith.divf %154, %155 : vector<2x32xf32>
    %157 = vector.extract_strided_slice %150 {offsets = [0, 32], sizes = [2, 32], strides = [1, 1]} : vector<2x128xf32> to vector<2x32xf32>
    %158 = arith.negf %157 : vector<2x32xf32>
    %159 = math.exp %158 : vector<2x32xf32>
    %cst_29 = arith.constant 1.000000e+00 : f32
    %160 = vector.broadcast %cst_29 : f32 to vector<2x32xf32>
    %161 = arith.addf %160, %159 : vector<2x32xf32>
    %162 = arith.divf %160, %161 : vector<2x32xf32>
    %163 = vector.extract_strided_slice %150 {offsets = [0, 64], sizes = [2, 32], strides = [1, 1]} : vector<2x128xf32> to vector<2x32xf32>
    %164 = math.tanh %163 : vector<2x32xf32>
    %165 = vector.extract_strided_slice %150 {offsets = [0, 96], sizes = [2, 32], strides = [1, 1]} : vector<2x128xf32> to vector<2x32xf32>
    %166 = arith.negf %165 : vector<2x32xf32>
    %167 = math.exp %166 : vector<2x32xf32>
    %cst_30 = arith.constant 1.000000e+00 : f32
    %168 = vector.broadcast %cst_30 : f32 to vector<2x32xf32>
    %169 = arith.addf %168, %167 : vector<2x32xf32>
    %170 = arith.divf %168, %169 : vector<2x32xf32>
    %171 = arith.mulf %162, %145 : vector<2x32xf32>
    %172 = arith.mulf %156, %164 : vector<2x32xf32>
    %173 = arith.addf %171, %172 : vector<2x32xf32>
    %174 = math.tanh %173 : vector<2x32xf32>
    %175 = arith.mulf %170, %174 : vector<2x32xf32>
    %176 = vector.extract_strided_slice %89 {offsets = [6, 0], sizes = [2, 128], strides = [1, 1]} : vector<16x128xf32> to vector<2x128xf32>
    %cst_31 = arith.constant dense<0.000000e+00> : vector<2x128xf32>
    %177 = tpu.matmul %175, %1, %cst_31 {dimension_numbers = #tpu.dot_dimension_numbers<[1], [0], [0], [1], [0, 0, 1, 1], [], []>} : vector<2x32xf32>, vector<32x128xf32>, vector<2x128xf32> -> vector<2x128xf32>
    %178 = arith.addf %176, %177 : vector<2x128xf32>
    %179 = vector.extract_strided_slice %178 {offsets = [0, 0], sizes = [2, 32], strides = [1, 1]} : vector<2x128xf32> to vector<2x32xf32>
    %180 = arith.negf %179 : vector<2x32xf32>
    %181 = math.exp %180 : vector<2x32xf32>
    %cst_32 = arith.constant 1.000000e+00 : f32
    %182 = vector.broadcast %cst_32 : f32 to vector<2x32xf32>
    %183 = arith.addf %182, %181 : vector<2x32xf32>
    %184 = arith.divf %182, %183 : vector<2x32xf32>
    %185 = vector.extract_strided_slice %178 {offsets = [0, 32], sizes = [2, 32], strides = [1, 1]} : vector<2x128xf32> to vector<2x32xf32>
    %186 = arith.negf %185 : vector<2x32xf32>
    %187 = math.exp %186 : vector<2x32xf32>
    %cst_33 = arith.constant 1.000000e+00 : f32
    %188 = vector.broadcast %cst_33 : f32 to vector<2x32xf32>
    %189 = arith.addf %188, %187 : vector<2x32xf32>
    %190 = arith.divf %188, %189 : vector<2x32xf32>
    %191 = vector.extract_strided_slice %178 {offsets = [0, 64], sizes = [2, 32], strides = [1, 1]} : vector<2x128xf32> to vector<2x32xf32>
    %192 = math.tanh %191 : vector<2x32xf32>
    %193 = vector.extract_strided_slice %178 {offsets = [0, 96], sizes = [2, 32], strides = [1, 1]} : vector<2x128xf32> to vector<2x32xf32>
    %194 = arith.negf %193 : vector<2x32xf32>
    %195 = math.exp %194 : vector<2x32xf32>
    %cst_34 = arith.constant 1.000000e+00 : f32
    %196 = vector.broadcast %cst_34 : f32 to vector<2x32xf32>
    %197 = arith.addf %196, %195 : vector<2x32xf32>
    %198 = arith.divf %196, %197 : vector<2x32xf32>
    %199 = arith.mulf %190, %173 : vector<2x32xf32>
    %200 = arith.mulf %184, %192 : vector<2x32xf32>
    %201 = arith.addf %199, %200 : vector<2x32xf32>
    %202 = math.tanh %201 : vector<2x32xf32>
    %203 = arith.mulf %198, %202 : vector<2x32xf32>
    %204 = vector.extract_strided_slice %89 {offsets = [8, 0], sizes = [2, 128], strides = [1, 1]} : vector<16x128xf32> to vector<2x128xf32>
    %cst_35 = arith.constant dense<0.000000e+00> : vector<2x128xf32>
    %205 = tpu.matmul %203, %1, %cst_35 {dimension_numbers = #tpu.dot_dimension_numbers<[1], [0], [0], [1], [0, 0, 1, 1], [], []>} : vector<2x32xf32>, vector<32x128xf32>, vector<2x128xf32> -> vector<2x128xf32>
    %206 = arith.addf %204, %205 : vector<2x128xf32>
    %207 = vector.extract_strided_slice %206 {offsets = [0, 0], sizes = [2, 32], strides = [1, 1]} : vector<2x128xf32> to vector<2x32xf32>
    %208 = arith.negf %207 : vector<2x32xf32>
    %209 = math.exp %208 : vector<2x32xf32>
    %cst_36 = arith.constant 1.000000e+00 : f32
    %210 = vector.broadcast %cst_36 : f32 to vector<2x32xf32>
    %211 = arith.addf %210, %209 : vector<2x32xf32>
    %212 = arith.divf %210, %211 : vector<2x32xf32>
    %213 = vector.extract_strided_slice %206 {offsets = [0, 32], sizes = [2, 32], strides = [1, 1]} : vector<2x128xf32> to vector<2x32xf32>
    %214 = arith.negf %213 : vector<2x32xf32>
    %215 = math.exp %214 : vector<2x32xf32>
    %cst_37 = arith.constant 1.000000e+00 : f32
    %216 = vector.broadcast %cst_37 : f32 to vector<2x32xf32>
    %217 = arith.addf %216, %215 : vector<2x32xf32>
    %218 = arith.divf %216, %217 : vector<2x32xf32>
    %219 = vector.extract_strided_slice %206 {offsets = [0, 64], sizes = [2, 32], strides = [1, 1]} : vector<2x128xf32> to vector<2x32xf32>
    %220 = math.tanh %219 : vector<2x32xf32>
    %221 = vector.extract_strided_slice %206 {offsets = [0, 96], sizes = [2, 32], strides = [1, 1]} : vector<2x128xf32> to vector<2x32xf32>
    %222 = arith.negf %221 : vector<2x32xf32>
    %223 = math.exp %222 : vector<2x32xf32>
    %cst_38 = arith.constant 1.000000e+00 : f32
    %224 = vector.broadcast %cst_38 : f32 to vector<2x32xf32>
    %225 = arith.addf %224, %223 : vector<2x32xf32>
    %226 = arith.divf %224, %225 : vector<2x32xf32>
    %227 = arith.mulf %218, %201 : vector<2x32xf32>
    %228 = arith.mulf %212, %220 : vector<2x32xf32>
    %229 = arith.addf %227, %228 : vector<2x32xf32>
    %230 = math.tanh %229 : vector<2x32xf32>
    %231 = arith.mulf %226, %230 : vector<2x32xf32>
    %232 = vector.extract_strided_slice %89 {offsets = [10, 0], sizes = [2, 128], strides = [1, 1]} : vector<16x128xf32> to vector<2x128xf32>
    %cst_39 = arith.constant dense<0.000000e+00> : vector<2x128xf32>
    %233 = tpu.matmul %231, %1, %cst_39 {dimension_numbers = #tpu.dot_dimension_numbers<[1], [0], [0], [1], [0, 0, 1, 1], [], []>} : vector<2x32xf32>, vector<32x128xf32>, vector<2x128xf32> -> vector<2x128xf32>
    %234 = arith.addf %232, %233 : vector<2x128xf32>
    %235 = vector.extract_strided_slice %234 {offsets = [0, 0], sizes = [2, 32], strides = [1, 1]} : vector<2x128xf32> to vector<2x32xf32>
    %236 = arith.negf %235 : vector<2x32xf32>
    %237 = math.exp %236 : vector<2x32xf32>
    %cst_40 = arith.constant 1.000000e+00 : f32
    %238 = vector.broadcast %cst_40 : f32 to vector<2x32xf32>
    %239 = arith.addf %238, %237 : vector<2x32xf32>
    %240 = arith.divf %238, %239 : vector<2x32xf32>
    %241 = vector.extract_strided_slice %234 {offsets = [0, 32], sizes = [2, 32], strides = [1, 1]} : vector<2x128xf32> to vector<2x32xf32>
    %242 = arith.negf %241 : vector<2x32xf32>
    %243 = math.exp %242 : vector<2x32xf32>
    %cst_41 = arith.constant 1.000000e+00 : f32
    %244 = vector.broadcast %cst_41 : f32 to vector<2x32xf32>
    %245 = arith.addf %244, %243 : vector<2x32xf32>
    %246 = arith.divf %244, %245 : vector<2x32xf32>
    %247 = vector.extract_strided_slice %234 {offsets = [0, 64], sizes = [2, 32], strides = [1, 1]} : vector<2x128xf32> to vector<2x32xf32>
    %248 = math.tanh %247 : vector<2x32xf32>
    %249 = vector.extract_strided_slice %234 {offsets = [0, 96], sizes = [2, 32], strides = [1, 1]} : vector<2x128xf32> to vector<2x32xf32>
    %250 = arith.negf %249 : vector<2x32xf32>
    %251 = math.exp %250 : vector<2x32xf32>
    %cst_42 = arith.constant 1.000000e+00 : f32
    %252 = vector.broadcast %cst_42 : f32 to vector<2x32xf32>
    %253 = arith.addf %252, %251 : vector<2x32xf32>
    %254 = arith.divf %252, %253 : vector<2x32xf32>
    %255 = arith.mulf %246, %229 : vector<2x32xf32>
    %256 = arith.mulf %240, %248 : vector<2x32xf32>
    %257 = arith.addf %255, %256 : vector<2x32xf32>
    %258 = math.tanh %257 : vector<2x32xf32>
    %259 = arith.mulf %254, %258 : vector<2x32xf32>
    %260 = vector.extract_strided_slice %89 {offsets = [12, 0], sizes = [2, 128], strides = [1, 1]} : vector<16x128xf32> to vector<2x128xf32>
    %cst_43 = arith.constant dense<0.000000e+00> : vector<2x128xf32>
    %261 = tpu.matmul %259, %1, %cst_43 {dimension_numbers = #tpu.dot_dimension_numbers<[1], [0], [0], [1], [0, 0, 1, 1], [], []>} : vector<2x32xf32>, vector<32x128xf32>, vector<2x128xf32> -> vector<2x128xf32>
    %262 = arith.addf %260, %261 : vector<2x128xf32>
    %263 = vector.extract_strided_slice %262 {offsets = [0, 0], sizes = [2, 32], strides = [1, 1]} : vector<2x128xf32> to vector<2x32xf32>
    %264 = arith.negf %263 : vector<2x32xf32>
    %265 = math.exp %264 : vector<2x32xf32>
    %cst_44 = arith.constant 1.000000e+00 : f32
    %266 = vector.broadcast %cst_44 : f32 to vector<2x32xf32>
    %267 = arith.addf %266, %265 : vector<2x32xf32>
    %268 = arith.divf %266, %267 : vector<2x32xf32>
    %269 = vector.extract_strided_slice %262 {offsets = [0, 32], sizes = [2, 32], strides = [1, 1]} : vector<2x128xf32> to vector<2x32xf32>
    %270 = arith.negf %269 : vector<2x32xf32>
    %271 = math.exp %270 : vector<2x32xf32>
    %cst_45 = arith.constant 1.000000e+00 : f32
    %272 = vector.broadcast %cst_45 : f32 to vector<2x32xf32>
    %273 = arith.addf %272, %271 : vector<2x32xf32>
    %274 = arith.divf %272, %273 : vector<2x32xf32>
    %275 = vector.extract_strided_slice %262 {offsets = [0, 64], sizes = [2, 32], strides = [1, 1]} : vector<2x128xf32> to vector<2x32xf32>
    %276 = math.tanh %275 : vector<2x32xf32>
    %277 = vector.extract_strided_slice %262 {offsets = [0, 96], sizes = [2, 32], strides = [1, 1]} : vector<2x128xf32> to vector<2x32xf32>
    %278 = arith.negf %277 : vector<2x32xf32>
    %279 = math.exp %278 : vector<2x32xf32>
    %cst_46 = arith.constant 1.000000e+00 : f32
    %280 = vector.broadcast %cst_46 : f32 to vector<2x32xf32>
    %281 = arith.addf %280, %279 : vector<2x32xf32>
    %282 = arith.divf %280, %281 : vector<2x32xf32>
    %283 = arith.mulf %274, %257 : vector<2x32xf32>
    %284 = arith.mulf %268, %276 : vector<2x32xf32>
    %285 = arith.addf %283, %284 : vector<2x32xf32>
    %286 = math.tanh %285 : vector<2x32xf32>
    %287 = arith.mulf %282, %286 : vector<2x32xf32>
    %288 = vector.extract_strided_slice %89 {offsets = [14, 0], sizes = [2, 128], strides = [1, 1]} : vector<16x128xf32> to vector<2x128xf32>
    %cst_47 = arith.constant dense<0.000000e+00> : vector<2x128xf32>
    %289 = tpu.matmul %287, %1, %cst_47 {dimension_numbers = #tpu.dot_dimension_numbers<[1], [0], [0], [1], [0, 0, 1, 1], [], []>} : vector<2x32xf32>, vector<32x128xf32>, vector<2x128xf32> -> vector<2x128xf32>
    %290 = arith.addf %288, %289 : vector<2x128xf32>
    %291 = vector.extract_strided_slice %290 {offsets = [0, 0], sizes = [2, 32], strides = [1, 1]} : vector<2x128xf32> to vector<2x32xf32>
    %292 = arith.negf %291 : vector<2x32xf32>
    %293 = math.exp %292 : vector<2x32xf32>
    %cst_48 = arith.constant 1.000000e+00 : f32
    %294 = vector.broadcast %cst_48 : f32 to vector<2x32xf32>
    %295 = arith.addf %294, %293 : vector<2x32xf32>
    %296 = arith.divf %294, %295 : vector<2x32xf32>
    %297 = vector.extract_strided_slice %290 {offsets = [0, 32], sizes = [2, 32], strides = [1, 1]} : vector<2x128xf32> to vector<2x32xf32>
    %298 = arith.negf %297 : vector<2x32xf32>
    %299 = math.exp %298 : vector<2x32xf32>
    %cst_49 = arith.constant 1.000000e+00 : f32
    %300 = vector.broadcast %cst_49 : f32 to vector<2x32xf32>
    %301 = arith.addf %300, %299 : vector<2x32xf32>
    %302 = arith.divf %300, %301 : vector<2x32xf32>
    %303 = vector.extract_strided_slice %290 {offsets = [0, 64], sizes = [2, 32], strides = [1, 1]} : vector<2x128xf32> to vector<2x32xf32>
    %304 = math.tanh %303 : vector<2x32xf32>
    %305 = vector.extract_strided_slice %290 {offsets = [0, 96], sizes = [2, 32], strides = [1, 1]} : vector<2x128xf32> to vector<2x32xf32>
    %306 = arith.negf %305 : vector<2x32xf32>
    %307 = math.exp %306 : vector<2x32xf32>
    %cst_50 = arith.constant 1.000000e+00 : f32
    %308 = vector.broadcast %cst_50 : f32 to vector<2x32xf32>
    %309 = arith.addf %308, %307 : vector<2x32xf32>
    %310 = arith.divf %308, %309 : vector<2x32xf32>
    %311 = arith.mulf %302, %285 : vector<2x32xf32>
    %312 = arith.mulf %296, %304 : vector<2x32xf32>
    %313 = arith.addf %311, %312 : vector<2x32xf32>
    %314 = math.tanh %313 : vector<2x32xf32>
    %315 = arith.mulf %310, %314 : vector<2x32xf32>
    %316 = tpu.concatenate %119, %147, %175, %203, %231, %259, %287, %315 in 0 : vector<2x32xf32>, vector<2x32xf32>, vector<2x32xf32>, vector<2x32xf32>, vector<2x32xf32>, vector<2x32xf32>, vector<2x32xf32>, vector<2x32xf32> -> vector<16x32xf32>
    %cst_51 = arith.constant dense<0.000000e+00> : vector<16x4xf32>
    %317 = tpu.matmul %316, %6, %cst_51 {dimension_numbers = #tpu.dot_dimension_numbers<[1], [0], [0], [1], [0, 0, 1, 1], [], []>} : vector<16x32xf32>, vector<32x4xf32>, vector<16x4xf32> -> vector<16x4xf32>
    %318 = vector.broadcast %5 : vector<1x4xf32> to vector<16x4xf32>
    %319 = arith.addf %317, %318 : vector<16x4xf32>
    %320 = arith.addf %86, %319 : vector<16x4xf32>
    %321 = arith.subf %8, %320 : vector<16x4xf32>
    %322 = arith.addf %320, %321 : vector<16x4xf32>
    %c0_52 = arith.constant 0 : index
    %c0_53 = arith.constant 0 : index
    %323 = vector.load %arg3[%c0_52, %c0_53] : memref<16x4xf32, #tpu.memory_space<vmem>>, vector<16x4xf32>
    tpu.vector_store %arg3[%c0_52, %c0_53], %322 {strides = array<i32>} : memref<16x4xf32, #tpu.memory_space<vmem>>, vector<16x4xf32>,
    return
  }
}

</mosaic_0001>

<llo_original>
// kernel: tpu_custom_call.1
$region0: #{tpu_custom_call.1}
  #allocation0 [shape = 'u32[]', space=smem, size = 0x4, offset = 0x4, fixed_abs, tag = 'smem constant byte address 0x4 - core index']
  #allocation1 [shape = 'u32[144,128]{1,0:T(1,128)}', space=vmem, size = 0x12000, scoped, tag = 'internal scratch']
  %s0 = inlined_call_operand.vmem [shape: f32[24,4], index: 0, kind: input, shape index: {}]
  %s1 = inlined_call_operand.vmem [shape: f32[48,128], index: 1, kind: input, shape index: {}]
  %s2 = inlined_call_operand.vmem [shape: f32[56,4], index: 2, kind: input, shape index: {}]
  %s3 = inlined_call_operand.vmem [shape: f32[16,4], index: 3, kind: output, shape index: {}]
  %s4 = sld [smem:[#allocation0]]
  $region22: #{tpu_custom_call.1} parent=0
    _
  %s6 = ssub.s32 1, %s4
  %s7 = scalar_select 0, %s6, %s4
  // Predicated region
  $region2: #{tpu_custom_call.1} parent=0 // pred_check
    _
  $region3: #{tpu_custom_call.1} parent=0 // pred_check_branch
    %9 = sbr.rel (0) target = $region5
  $region4: #{tpu_custom_call.1} parent=0 // pred_region
    _
  $region5: #{tpu_custom_call.1} parent=0 // pred_fallthru
    _
  // Predicated region
  $region6: #{tpu_custom_call.1} parent=0 // pred_check
    _
  $region7: #{tpu_custom_call.1} parent=0 // pred_check_branch
    %11 = sbr.rel (0) target = $region9
  $region8: #{tpu_custom_call.1} parent=0 // pred_region
    _
  $region9: #{tpu_custom_call.1} parent=0 // pred_fallthru
    _
  // Predicated region
  $region10: #{tpu_custom_call.1} parent=0 // pred_check
    _
  $region11: #{tpu_custom_call.1} parent=0 // pred_check_branch
    %13 = sbr.rel (0) target = $region13
  $region12: #{tpu_custom_call.1} parent=0 // pred_region
    _
  $region13: #{tpu_custom_call.1} parent=0 // pred_fallthru
    _
  %v14 = vld [vmem:[%s1] sm:$0xf]
  %v15 = vld [vmem:[%s1 + $0x8] sm:$0xff]
  %v16 = vld [vmem:[%s1 + $0x10] sm:$0xff]
  %v17 = vld [vmem:[%s1 + $0x18] sm:$0xff]
  %v18 = vld [vmem:[%s1 + $0x20] sm:$0xff]
  %v19 = vld [vmem:[%s1 + $0x28] sm:$0x1]
  %v20 = vld [vmem:[%s2] sm:$0xf]
  %v21 = vld [vmem:[%s2 + $0x8] sm:$0x1]
  %v22 = vld [vmem:[%s2 + $0x10] sm:$0x1]
  %v23 = vld [vmem:[%s2 + $0x18] sm:$0xff]
  %v24 = vld [vmem:[%s2 + $0x20] sm:$0xff]
  %v25 = vld [vmem:[%s2 + $0x28] sm:$0xff]
  %v26 = vld [vmem:[%s2 + $0x30] sm:$0xff]
  %v27 = vld [vmem:[%s0] sm:$0xff]
  %v28 = vld [vmem:[%s0 + $0x8] sm:$0xff]
  %v29 = vld [vmem:[%s0 + $0x10] sm:$0xff]
  %vm33 = vcmask 1045504
  %v34 = vrot.slane %v27, 2
  %v35 = vrot.slane %v28, 2
  %v36 = vsel %vm33, %v34, %v35
  %v37 = vrot.slane %v29, 2
  %v38 = vsel %vm33, %v35, %v37
  %v41 = vadd.f32 %v27, %v36
  %v42 = vadd.f32 %v28, %v38
  %vm43 = vcmask 1043456
  %v44 = vrot.slane %v27, 4
  %v45 = vrot.slane %v28, 4
  %v46 = vsel %vm43, %v44, %v45
  %v47 = vrot.slane %v29, 4
  %v48 = vsel %vm43, %v45, %v47
  %v51 = vadd.f32 %v41, %v46
  %v52 = vadd.f32 %v42, %v48
  %vm53 = vcmask 1041408
  %v54 = vrot.slane %v27, 6
  %v55 = vrot.slane %v28, 6
  %v56 = vsel %vm53, %v54, %v55
  %v57 = vrot.slane %v29, 6
  %v58 = vsel %vm53, %v55, %v57
  %v61 = vadd.f32 %v51, %v56
  %v62 = vadd.f32 %v52, %v58
  %v63 = vadd.f32 %v61, %v28
  %v64 = vadd.f32 %v62, %v29
  %v65 = vmul.f32 %v63, 0.2
  %v66 = vmul.f32 %v64, 0.2
  %v69 = vrot.slane %v65, 4
  %v70 = vrot.slane %v66, 4
  %v71 = vsel %vm43, %v69, %v70
  %v75 = vsub.f32 %v27, %v69
  %v76 = vsub.f32 %v28, %v71
  %v77 = vsub.f32 %v29, %v70
  %v78 = vrot.slane %v65, 2
  %v80 = vadd.f32 %v65, %v78
  %v81 = vadd.f32 %v80, %v69
  %v82 = vrot.slane %v65, 6
  %v84 = vadd.f32 %v81, %v82
  %v85 = vadd.f32 %v84, %v66
  %v86 = vrot.slane %v66, 2
  %v88 = vadd.f32 %v85, %v86
  %v89 = vadd.f32 %v88, %v70
  %v90 = vrot.slane %v66, 6
  %v92 = vadd.f32 %v89, %v90
  %v93 = vmul.f32 %v92, 0.125
  %v94 = vsub.f32 %v65, %v93
  %v95 = vmul.f32 %v94, %v94
  %v97 = vrot.slane %v93, 6
  %v99 = vsub.f32 %v65, %v97
  %v100 = vmul.f32 %v99, %v99
  %v102 = vrot.slane %v100, 2
  %v104 = vadd.f32 %v95, %v102
  %v105 = vrot.slane %v93, 4
  %v107 = vsub.f32 %v65, %v105
  %v108 = vmul.f32 %v107, %v107
  %v110 = vrot.slane %v108, 4
  %v112 = vadd.f32 %v104, %v110
  %v113 = vrot.slane %v93, 2
  %v115 = vsub.f32 %v65, %v113
  %v116 = vmul.f32 %v115, %v115
  %v118 = vrot.slane %v116, 6
  %v120 = vadd.f32 %v112, %v118
  %v121 = vsub.f32 %v66, %v93
  %v122 = vmul.f32 %v121, %v121
  %v123 = vadd.f32 %v120, %v122
  %v124 = vsub.f32 %v66, %v97
  %v125 = vmul.f32 %v124, %v124
  %v127 = vrot.slane %v125, 2
  %v129 = vadd.f32 %v123, %v127
  %v130 = vsub.f32 %v66, %v105
  %v131 = vmul.f32 %v130, %v130
  %v133 = vrot.slane %v131, 4
  %v135 = vadd.f32 %v129, %v133
  %v136 = vsub.f32 %v66, %v113
  %v137 = vmul.f32 %v136, %v136
  %v139 = vrot.slane %v137, 6
  %v141 = vadd.f32 %v135, %v139
  %v142 = vmul.f32 %v141, 0.125
  %v143 = vadd.f32 %v142, 1e-05
  %v144 = vrsqrt.pop %v143
  %v145 = vrsqrt.pop %v143
  %v146 = vmul.f32 %v143, %v145
  %vm147 = vcmp.eq.f32.partialorder %v143, inf
  %v148 = vsel %vm147, %v143, %v146
  %vm149 = vcmp.eq.f32.partialorder %v143, 0.0
  %v150 = vand.u32 %v143, 2147483648
  %v151 = vsel %vm149, %v150, %v148
  %v152 = vsel %vm53, %v93, %v97
  %v153 = vsel %vm43, %v152, %v105
  %v154 = vsel %vm33, %v153, %v113
  %v156 = vrot.slane %v144, 6
  %v158 = vrot.slane %v144, 4
  %v160 = vrot.slane %v144, 2
  %v162 = vsel %vm53, %v144, %v156
  %v163 = vsel %vm43, %v162, %v158
  %v164 = vsel %vm33, %v163, %v160
  %v166 = vrot.slane %v151, 6
  %v168 = vrot.slane %v151, 4
  %v170 = vrot.slane %v151, 2
  %v172 = vsel %vm53, %v151, %v166
  %v173 = vsel %vm43, %v172, %v168
  %v174 = vsel %vm33, %v173, %v170
  %v175 = vsub.f32 %v65, %v154
  %v176 = vsub.f32 %v66, %v154
  %v177 = vmul.f32 %v175, %v164
  %v178 = vmul.f32 %v176, %v164
  %v179 = vlaneseq
  %v180 = vshrl.u32 %v179, 7
  %v181 = vsub.s32 0, %v180
  %v182 = vrot.slane %v21, %v181
  %vm183 = vcmask 31744
  %v185 = vsel %vm183, %v177, 0
  %v188 = vsel %vm183, %v178, 0
  %v191 = vsel %vm43, %v20, 0
  %193 = vmatprep.subr.mxu0 0.0
  %194 = vmatpush1.msra.mxu0 %v191
  %195 = vmatprep.subr.mxu0 0.0
  %196 = vmatpush1.msra.mxu0 0.0
  %197 = vmatprep.subr.mxu0 0.0
  %198 = vmatpush1.msra.mxu0 0.0
  %199 = vmatprep.subr.mxu0 0.0
  %200 = vmatpush1.msra.mxu0 0.0
  %201 = vmatprep.subr.mxu0 0.0
  %202 = vmatpush1.msra.mxu0 0.0
  %203 = vmatprep.subr.mxu0 0.0
  %204 = vmatpush1.msra.mxu0 0.0
  %205 = vmatprep.subr.mxu0 0.0
  %206 = vmatpush1.msra.mxu0 0.0
  %207 = vmatprep.subr.mxu0 0.0
  %208 = vmatpush1.msra.mxu0 0.0
  %209 = vmatprep.subr.mxu0 0.0
  %210 = vmatpush1.msra.mxu0 0.0
  %211 = vmatprep.subr.mxu0 0.0
  %212 = vmatpush1.msra.mxu0 0.0
  %213 = vmatprep.subr.mxu0 0.0
  %214 = vmatpush1.msra.mxu0 0.0
  %215 = vmatprep.subr.mxu0 0.0
  %216 = vmatpush1.msra.mxu0 0.0
  %217 = vmatprep.subr.mxu0 0.0
  %218 = vmatpush1.msra.mxu0 0.0
  %219 = vmatprep.subr.mxu0 0.0
  %220 = vmatpush1.msra.mxu0 0.0
  %221 = vmatprep.subr.mxu0 0.0
  %222 = vmatpush1.msra.mxu0 0.0
  %223 = vmatprep.subr.mxu0 0.0
  %224 = vmatpush1.msra.mxu0 0.0
  %225 = vmatprep.subr.mxu0 0.0
  %226 = vmatpush1.msra.mxu0 0.0
  %227 = vmatprep.subr.mxu0 0.0
  %228 = vmatpush1.msra.mxu0 0.0
  %229 = vmatprep.subr.mxu0 0.0
  %230 = vmatpush1.msra.mxu0 0.0
  %231 = vmatprep.subr.mxu0 0.0
  %232 = vmatpush1.msra.mxu0 0.0
  %233 = vmatprep.subr.mxu0 0.0
  %234 = vmatpush1.msra.mxu0 0.0
  %235 = vmatprep.subr.mxu0 0.0
  %236 = vmatpush1.msra.mxu0 0.0
  %237 = vmatprep.subr.mxu0 0.0
  %238 = vmatpush1.msra.mxu0 0.0
  %239 = vmatprep.subr.mxu0 0.0
  %240 = vmatpush1.msra.mxu0 0.0
  %241 = vmatprep.subr.mxu0 0.0
  %242 = vmatpush1.msra.mxu0 0.0
  %243 = vmatprep.subr.mxu0 0.0
  %244 = vmatpush1.msra.mxu0 0.0
  %245 = vmatprep.subr.mxu0 0.0
  %246 = vmatpush1.msra.mxu0 0.0
  %247 = vmatprep.subr.mxu0 0.0
  %248 = vmatpush1.msra.mxu0 0.0
  %249 = vmatprep.subr.mxu0 0.0
  %250 = vmatpush1.msra.mxu0 0.0
  %251 = vmatprep.subr.mxu0 0.0
  %252 = vmatpush1.msra.mxu0 0.0
  %253 = vmatprep.subr.mxu0 0.0
  %254 = vmatpush1.msra.mxu0 0.0
  %255 = vmatprep.subr.mxu0 0.0
  %256 = vmatpush1.msra.mxu0 0.0
  %257 = vmatprep.mubr.f32.mxu0 0.0
  %258 = vmatmul.mubr.f32.gmra.mrb[0].mxu0 %v185
  %v259 = vpop.f32.mrb[0].mxu0
  %v260 = vadd.f32 %v182, %v259
  %v261 = vpop.f32.mrb[0].mxu0
  %262 = vmatprep.mubr.f32.mxu0 0.0
  %263 = vmatmul.mubr.f32.gmra.mrb[0].mxu0 %v188
  %v264 = vpop.f32.mrb[0].mxu0
  %v265 = vadd.f32 %v182, %v264
  %v266 = vpop.f32.mrb[0].mxu0
  %267 = vdwg.mxu0
  %v268 = vmul.f32 %v260, %v174
  %v269 = vmul.f32 %v265, %v174
  %v270 = vadd.f32 %v268, %v154
  %v271 = vadd.f32 %v269, %v154
  %v272 = vlaneseq
  %v273 = vshrl.u32 %v272, 7
  %v274 = vsub.s32 0, %v273
  %v275 = vrot.slane %v19, %v274
  %v279 = vrot.slane %v75, 4
  %v280 = vrot.slane %v76, 4
  %v281 = vsel %vm43, %v279, %v280
  %v282 = vrot.slane %v77, 4
  %v283 = vsel %vm43, %v280, %v282
  %v284 = vsel %vm183, %v281, 0
  %v286 = vsel %vm183, %v283, 0
  %v289 = vsel %vm43, %v14, 0
  %291 = vmatprep.subr.mxu0 0.0
  %292 = vmatpush1.msra.mxu0 %v289
  %293 = vmatprep.subr.mxu0 0.0
  %294 = vmatpush1.msra.mxu0 0.0
  %295 = vmatprep.subr.mxu0 0.0
  %296 = vmatpush1.msra.mxu0 0.0
  %297 = vmatprep.subr.mxu0 0.0
  %298 = vmatpush1.msra.mxu0 0.0
  %299 = vmatprep.subr.mxu0 0.0
  %300 = vmatpush1.msra.mxu0 0.0
  %301 = vmatprep.subr.mxu0 0.0
  %302 = vmatpush1.msra.mxu0 0.0
  %303 = vmatprep.subr.mxu0 0.0
  %304 = vmatpush1.msra.mxu0 0.0
  %305 = vmatprep.subr.mxu0 0.0
  %306 = vmatpush1.msra.mxu0 0.0
  %307 = vmatprep.subr.mxu0 0.0
  %308 = vmatpush1.msra.mxu0 0.0
  %309 = vmatprep.subr.mxu0 0.0
  %310 = vmatpush1.msra.mxu0 0.0
  %311 = vmatprep.subr.mxu0 0.0
  %312 = vmatpush1.msra.mxu0 0.0
  %313 = vmatprep.subr.mxu0 0.0
  %314 = vmatpush1.msra.mxu0 0.0
  %315 = vmatprep.subr.mxu0 0.0
  %316 = vmatpush1.msra.mxu0 0.0
  %317 = vmatprep.subr.mxu0 0.0
  %318 = vmatpush1.msra.mxu0 0.0
  %319 = vmatprep.subr.mxu0 0.0
  %320 = vmatpush1.msra.mxu0 0.0
  %321 = vmatprep.subr.mxu0 0.0
  %322 = vmatpush1.msra.mxu0 0.0
  %323 = vmatprep.subr.mxu0 0.0
  %324 = vmatpush1.msra.mxu0 0.0
  %325 = vmatprep.subr.mxu0 0.0
  %326 = vmatpush1.msra.mxu0 0.0
  %327 = vmatprep.subr.mxu0 0.0
  %328 = vmatpush1.msra.mxu0 0.0
  %329 = vmatprep.subr.mxu0 0.0
  %330 = vmatpush1.msra.mxu0 0.0
  %331 = vmatprep.subr.mxu0 0.0
  %332 = vmatpush1.msra.mxu0 0.0
  %333 = vmatprep.subr.mxu0 0.0
  %334 = vmatpush1.msra.mxu0 0.0
  %335 = vmatprep.subr.mxu0 0.0
  %336 = vmatpush1.msra.mxu0 0.0
  %337 = vmatprep.subr.mxu0 0.0
  %338 = vmatpush1.msra.mxu0 0.0
  %339 = vmatprep.subr.mxu0 0.0
  %340 = vmatpush1.msra.mxu0 0.0
  %341 = vmatprep.subr.mxu0 0.0
  %342 = vmatpush1.msra.mxu0 0.0
  %343 = vmatprep.subr.mxu0 0.0
  %344 = vmatpush1.msra.mxu0 0.0
  %345 = vmatprep.subr.mxu0 0.0
  %346 = vmatpush1.msra.mxu0 0.0
  %347 = vmatprep.subr.mxu0 0.0
  %348 = vmatpush1.msra.mxu0 0.0
  %349 = vmatprep.subr.mxu0 0.0
  %350 = vmatpush1.msra.mxu0 0.0
  %351 = vmatprep.subr.mxu0 0.0
  %352 = vmatpush1.msra.mxu0 0.0
  %353 = vmatprep.subr.mxu0 0.0
  %354 = vmatpush1.msra.mxu0 0.0
  %355 = vmatprep.mubr.f32.mxu0 0.0
  %356 = vmatmul.mubr.f32.gmra.mrb[0].mxu0 %v284
  %v357 = vpop.f32.mrb[0].mxu0
  %v358 = vadd.f32 %v275, %v357
  %v359 = vpop.f32.mrb[0].mxu0
  %360 = vmatprep.mubr.f32.mxu0 0.0
  %361 = vmatmul.mubr.f32.gmra.mrb[0].mxu0 %v286
  %v362 = vpop.f32.mrb[0].mxu0
  %v363 = vadd.f32 %v275, %v362
  %v364 = vpop.f32.mrb[0].mxu0
  %365 = vdwg.mxu0
  %vm366 = vcmask 261120
  %v368 = vsel %vm366, 0.0, 0
  %370 = vmatprep.subr.mxu0 0.0
  %371 = vmatpush1.msra.mxu0 %v15
  %372 = vmatprep.subr.mxu0 0.0
  %373 = vmatpush1.msra.mxu0 %v16
  %374 = vmatprep.subr.mxu0 0.0
  %375 = vmatpush1.msra.mxu0 %v17
  %376 = vmatprep.subr.mxu0 0.0
  %377 = vmatpush1.msra.mxu0 %v18
  %378 = vmatprep.subr.mxu0 0.0
  %379 = vmatpush1.msra.mxu0 0.0
  %380 = vmatprep.subr.mxu0 0.0
  %381 = vmatpush1.msra.mxu0 0.0
  %382 = vmatprep.subr.mxu0 0.0
  %383 = vmatpush1.msra.mxu0 0.0
  %384 = vmatprep.subr.mxu0 0.0
  %385 = vmatpush1.msra.mxu0 0.0
  %386 = vmatprep.subr.mxu0 0.0
  %387 = vmatpush1.msra.mxu0 0.0
  %388 = vmatprep.subr.mxu0 0.0
  %389 = vmatpush1.msra.mxu0 0.0
  %390 = vmatprep.subr.mxu0 0.0
  %391 = vmatpush1.msra.mxu0 0.0
  %392 = vmatprep.subr.mxu0 0.0
  %393 = vmatpush1.msra.mxu0 0.0
  %394 = vmatprep.subr.mxu0 0.0
  %395 = vmatpush1.msra.mxu0 0.0
  %396 = vmatprep.subr.mxu0 0.0
  %397 = vmatpush1.msra.mxu0 0.0
  %398 = vmatprep.subr.mxu0 0.0
  %399 = vmatpush1.msra.mxu0 0.0
  %400 = vmatprep.subr.mxu0 0.0
  %401 = vmatpush1.msra.mxu0 0.0
  %402 = vmatprep.subr.mxu0 0.0
  %403 = vmatpush1.msra.mxu0 0.0
  %404 = vmatprep.subr.mxu0 0.0
  %405 = vmatpush1.msra.mxu0 0.0
  %406 = vmatprep.subr.mxu0 0.0
  %407 = vmatpush1.msra.mxu0 0.0
  %408 = vmatprep.subr.mxu0 0.0
  %409 = vmatpush1.msra.mxu0 0.0
  %410 = vmatprep.subr.mxu0 0.0
  %411 = vmatpush1.msra.mxu0 0.0
  %412 = vmatprep.subr.mxu0 0.0
  %413 = vmatpush1.msra.mxu0 0.0
  %414 = vmatprep.subr.mxu0 0.0
  %415 = vmatpush1.msra.mxu0 0.0
  %416 = vmatprep.subr.mxu0 0.0
  %417 = vmatpush1.msra.mxu0 0.0
  %418 = vmatprep.subr.mxu0 0.0
  %419 = vmatpush1.msra.mxu0 0.0
  %420 = vmatprep.subr.mxu0 0.0
  %421 = vmatpush1.msra.mxu0 0.0
  %422 = vmatprep.subr.mxu0 0.0
  %423 = vmatpush1.msra.mxu0 0.0
  %424 = vmatprep.subr.mxu0 0.0
  %425 = vmatpush1.msra.mxu0 0.0
  %426 = vmatprep.subr.mxu0 0.0
  %427 = vmatpush1.msra.mxu0 0.0
  %428 = vmatprep.subr.mxu0 0.0
  %429 = vmatpush1.msra.mxu0 0.0
  %430 = vmatprep.subr.mxu0 0.0
  %431 = vmatpush1.msra.mxu0 0.0
  %432 = vmatprep.subr.mxu0 0.0
  %433 = vmatpush1.msra.mxu0 0.0
  %434 = vmatprep.mubr.f32.mxu0 0.0
  %435 = vmatmul.mubr.f32.gmra.mrb[0].mxu0 %v368
  %v436 = vpop.f32.mrb[0].mxu0
  %v437 = vadd.f32 0.0, %v436
  %v438 = vpop.f32.mrb[0].mxu0
  %439 = vdwg.mxu0
  %v440 = vadd.f32 %v358, %v437
  %v441 = vxor.u32 %v440, 2147483648
  %v442 = vmul.f32 %v441, 1.442695
  %v443 = vpow.pop %v442
  %v444 = vadd.f32 %v443, 1.0
  %v445 = vrcp.pop %v444
  %v446 = vmul.f32 1.0, %v445
  %v447 = vtanh.pop %v440
  %v448 = vmul.f32 %v446, 0.0
  %450 = vrot.lane.b32.xlu0 %v447, 64
  %v451 = vpop.permute.xlu0 %450
  %v453 = vmul.f32 %v446, %v451
  %455 = vrot.lane.b32.xlu0 %v453, 32
  %v456 = vpop.permute.xlu0 %455
  %v458 = vadd.f32 %v448, %v456
  %v459 = vtanh.pop %v458
  %461 = vrot.lane.b32.xlu0 %v459, 64
  %v462 = vpop.permute.xlu0 %461
  %v464 = vmul.f32 %v446, %v462
  %466 = vrot.lane.b32.xlu0 %v464, 32
  %v467 = vpop.permute.xlu0 %466
  %v468 = vsel %vm366, %v467, 0
  %470 = vmatprep.subr.mxu0 0.0
  %471 = vmatpush1.msra.mxu0 %v15
  %472 = vmatprep.subr.mxu0 0.0
  %473 = vmatpush1.msra.mxu0 %v16
  %474 = vmatprep.subr.mxu0 0.0
  %475 = vmatpush1.msra.mxu0 %v17
  %476 = vmatprep.subr.mxu0 0.0
  %477 = vmatpush1.msra.mxu0 %v18
  %478 = vmatprep.subr.mxu0 0.0
  %479 = vmatpush1.msra.mxu0 0.0
  %480 = vmatprep.subr.mxu0 0.0
  %481 = vmatpush1.msra.mxu0 0.0
  %482 = vmatprep.subr.mxu0 0.0
  %483 = vmatpush1.msra.mxu0 0.0
  %484 = vmatprep.subr.mxu0 0.0
  %485 = vmatpush1.msra.mxu0 0.0
  %486 = vmatprep.subr.mxu0 0.0
  %487 = vmatpush1.msra.mxu0 0.0
  %488 = vmatprep.subr.mxu0 0.0
  %489 = vmatpush1.msra.mxu0 0.0
  %490 = vmatprep.subr.mxu0 0.0
  %491 = vmatpush1.msra.mxu0 0.0
  %492 = vmatprep.subr.mxu0 0.0
  %493 = vmatpush1.msra.mxu0 0.0
  %494 = vmatprep.subr.mxu0 0.0
  %495 = vmatpush1.msra.mxu0 0.0
  %496 = vmatprep.subr.mxu0 0.0
  %497 = vmatpush1.msra.mxu0 0.0
  %498 = vmatprep.subr.mxu0 0.0
  %499 = vmatpush1.msra.mxu0 0.0
  %500 = vmatprep.subr.mxu0 0.0
  %501 = vmatpush1.msra.mxu0 0.0
  %502 = vmatprep.subr.mxu0 0.0
  %503 = vmatpush1.msra.mxu0 0.0
  %504 = vmatprep.subr.mxu0 0.0
  %505 = vmatpush1.msra.mxu0 0.0
  %506 = vmatprep.subr.mxu0 0.0
  %507 = vmatpush1.msra.mxu0 0.0
  %508 = vmatprep.subr.mxu0 0.0
  %509 = vmatpush1.msra.mxu0 0.0
  %510 = vmatprep.subr.mxu0 0.0
  %511 = vmatpush1.msra.mxu0 0.0
  %512 = vmatprep.subr.mxu0 0.0
  %513 = vmatpush1.msra.mxu0 0.0
  %514 = vmatprep.subr.mxu0 0.0
  %515 = vmatpush1.msra.mxu0 0.0
  %516 = vmatprep.subr.mxu0 0.0
  %517 = vmatpush1.msra.mxu0 0.0
  %518 = vmatprep.subr.mxu0 0.0
  %519 = vmatpush1.msra.mxu0 0.0
  %520 = vmatprep.subr.mxu0 0.0
  %521 = vmatpush1.msra.mxu0 0.0
  %522 = vmatprep.subr.mxu0 0.0
  %523 = vmatpush1.msra.mxu0 0.0
  %524 = vmatprep.subr.mxu0 0.0
  %525 = vmatpush1.msra.mxu0 0.0
  %526 = vmatprep.subr.mxu0 0.0
  %527 = vmatpush1.msra.mxu0 0.0
  %528 = vmatprep.subr.mxu0 0.0
  %529 = vmatpush1.msra.mxu0 0.0
  %530 = vmatprep.subr.mxu0 0.0
  %531 = vmatpush1.msra.mxu0 0.0
  %532 = vmatprep.subr.mxu0 0.0
  %533 = vmatpush1.msra.mxu0 0.0
  %534 = vmatprep.mubr.f32.mxu0 0.0
  %535 = vmatmul.mubr.f32.gmra.mrb[0].mxu0 %v468
  %v536 = vpop.f32.mrb[0].mxu0
  %v537 = vadd.f32 0.0, %v536
  %v538 = vpop.f32.mrb[0].mxu0
  %539 = vdwg.mxu0
  %v541 = vrot.slane %v537, 6
  %v543 = vadd.f32 %v358, %v541
  %v544 = vxor.u32 %v543, 2147483648
  %v545 = vmul.f32 %v544, 1.442695
  %v546 = vpow.pop %v545
  %v547 = vadd.f32 %v546, 1.0
  %v548 = vrcp.pop %v547
  %v549 = vmul.f32 1.0, %v548
  %v550 = vtanh.pop %v543
  %v552 = vrot.slane %v458, 6
  %v554 = vmul.f32 %v549, %v552
  %556 = vrot.lane.b32.xlu0 %v550, 64
  %v557 = vpop.permute.xlu0 %556
  %v559 = vmul.f32 %v549, %v557
  %561 = vrot.lane.b32.xlu0 %v559, 32
  %v562 = vpop.permute.xlu0 %561
  %v564 = vadd.f32 %v554, %v562
  %v565 = vtanh.pop %v564
  %567 = vrot.lane.b32.xlu0 %v565, 64
  %v568 = vpop.permute.xlu0 %567
  %v570 = vmul.f32 %v549, %v568
  %v572 = vrot.slane %v570, 2
  %573 = vrot.lane.b32.xlu0 %v572, 32
  %v574 = vpop.permute.xlu0 %573
  %v575 = vsel %vm366, %v574, 0
  %577 = vmatprep.subr.mxu0 0.0
  %578 = vmatpush1.msra.mxu0 %v15
  %579 = vmatprep.subr.mxu0 0.0
  %580 = vmatpush1.msra.mxu0 %v16
  %581 = vmatprep.subr.mxu0 0.0
  %582 = vmatpush1.msra.mxu0 %v17
  %583 = vmatprep.subr.mxu0 0.0
  %584 = vmatpush1.msra.mxu0 %v18
  %585 = vmatprep.subr.mxu0 0.0
  %586 = vmatpush1.msra.mxu0 0.0
  %587 = vmatprep.subr.mxu0 0.0
  %588 = vmatpush1.msra.mxu0 0.0
  %589 = vmatprep.subr.mxu0 0.0
  %590 = vmatpush1.msra.mxu0 0.0
  %591 = vmatprep.subr.mxu0 0.0
  %592 = vmatpush1.msra.mxu0 0.0
  %593 = vmatprep.subr.mxu0 0.0
  %594 = vmatpush1.msra.mxu0 0.0
  %595 = vmatprep.subr.mxu0 0.0
  %596 = vmatpush1.msra.mxu0 0.0
  %597 = vmatprep.subr.mxu0 0.0
  %598 = vmatpush1.msra.mxu0 0.0
  %599 = vmatprep.subr.mxu0 0.0
  %600 = vmatpush1.msra.mxu0 0.0
  %601 = vmatprep.subr.mxu0 0.0
  %602 = vmatpush1.msra.mxu0 0.0
  %603 = vmatprep.subr.mxu0 0.0
  %604 = vmatpush1.msra.mxu0 0.0
  %605 = vmatprep.subr.mxu0 0.0
  %606 = vmatpush1.msra.mxu0 0.0
  %607 = vmatprep.subr.mxu0 0.0
  %608 = vmatpush1.msra.mxu0 0.0
  %609 = vmatprep.subr.mxu0 0.0
  %610 = vmatpush1.msra.mxu0 0.0
  %611 = vmatprep.subr.mxu0 0.0
  %612 = vmatpush1.msra.mxu0 0.0
  %613 = vmatprep.subr.mxu0 0.0
  %614 = vmatpush1.msra.mxu0 0.0
  %615 = vmatprep.subr.mxu0 0.0
  %616 = vmatpush1.msra.mxu0 0.0
  %617 = vmatprep.subr.mxu0 0.0
  %618 = vmatpush1.msra.mxu0 0.0
  %619 = vmatprep.subr.mxu0 0.0
  %620 = vmatpush1.msra.mxu0 0.0
  %621 = vmatprep.subr.mxu0 0.0
  %622 = vmatpush1.msra.mxu0 0.0
  %623 = vmatprep.subr.mxu0 0.0
  %624 = vmatpush1.msra.mxu0 0.0
  %625 = vmatprep.subr.mxu0 0.0
  %626 = vmatpush1.msra.mxu0 0.0
  %627 = vmatprep.subr.mxu0 0.0
  %628 = vmatpush1.msra.mxu0 0.0
  %629 = vmatprep.subr.mxu0 0.0
  %630 = vmatpush1.msra.mxu0 0.0
  %631 = vmatprep.subr.mxu0 0.0
  %632 = vmatpush1.msra.mxu0 0.0
  %633 = vmatprep.subr.mxu0 0.0
  %634 = vmatpush1.msra.mxu0 0.0
  %635 = vmatprep.subr.mxu0 0.0
  %636 = vmatpush1.msra.mxu0 0.0
  %637 = vmatprep.subr.mxu0 0.0
  %638 = vmatpush1.msra.mxu0 0.0
  %639 = vmatprep.subr.mxu0 0.0
  %640 = vmatpush1.msra.mxu0 0.0
  %641 = vmatprep.mubr.f32.mxu0 0.0
  %642 = vmatmul.mubr.f32.gmra.mrb[0].mxu0 %v575
  %v643 = vpop.f32.mrb[0].mxu0
  %v644 = vadd.f32 0.0, %v643
  %v645 = vpop.f32.mrb[0].mxu0
  %646 = vdwg.mxu0
  %v648 = vrot.slane %v644, 4
  %v650 = vadd.f32 %v358, %v648
  %v651 = vxor.u32 %v650, 2147483648
  %v652 = vmul.f32 %v651, 1.442695
  %v653 = vpow.pop %v652
  %v654 = vadd.f32 %v653, 1.0
  %v655 = vrcp.pop %v654
  %v656 = vmul.f32 1.0, %v655
  %v657 = vtanh.pop %v650
  %v659 = vrot.slane %v564, 6
  %v661 = vmul.f32 %v656, %v659
  %663 = vrot.lane.b32.xlu0 %v657, 64
  %v664 = vpop.permute.xlu0 %663
  %v666 = vmul.f32 %v656, %v664
  %668 = vrot.lane.b32.xlu0 %v666, 32
  %v669 = vpop.permute.xlu0 %668
  %v671 = vadd.f32 %v661, %v669
  %v672 = vtanh.pop %v671
  %674 = vrot.lane.b32.xlu0 %v672, 64
  %v675 = vpop.permute.xlu0 %674
  %v677 = vmul.f32 %v656, %v675
  %v679 = vrot.slane %v677, 4
  %680 = vrot.lane.b32.xlu0 %v679, 32
  %v681 = vpop.permute.xlu0 %680
  %v682 = vsel %vm366, %v681, 0
  %684 = vmatprep.subr.mxu0 0.0
  %685 = vmatpush1.msra.mxu0 %v15
  %686 = vmatprep.subr.mxu0 0.0
  %687 = vmatpush1.msra.mxu0 %v16
  %688 = vmatprep.subr.mxu0 0.0
  %689 = vmatpush1.msra.mxu0 %v17
  %690 = vmatprep.subr.mxu0 0.0
  %691 = vmatpush1.msra.mxu0 %v18
  %692 = vmatprep.subr.mxu0 0.0
  %693 = vmatpush1.msra.mxu0 0.0
  %694 = vmatprep.subr.mxu0 0.0
  %695 = vmatpush1.msra.mxu0 0.0
  %696 = vmatprep.subr.mxu0 0.0
  %697 = vmatpush1.msra.mxu0 0.0
  %698 = vmatprep.subr.mxu0 0.0
  %699 = vmatpush1.msra.mxu0 0.0
  %700 = vmatprep.subr.mxu0 0.0
  %701 = vmatpush1.msra.mxu0 0.0
  %702 = vmatprep.subr.mxu0 0.0
  %703 = vmatpush1.msra.mxu0 0.0
  %704 = vmatprep.subr.mxu0 0.0
  %705 = vmatpush1.msra.mxu0 0.0
  %706 = vmatprep.subr.mxu0 0.0
  %707 = vmatpush1.msra.mxu0 0.0
  %708 = vmatprep.subr.mxu0 0.0
  %709 = vmatpush1.msra.mxu0 0.0
  %710 = vmatprep.subr.mxu0 0.0
  %711 = vmatpush1.msra.mxu0 0.0
  %712 = vmatprep.subr.mxu0 0.0
  %713 = vmatpush1.msra.mxu0 0.0
  %714 = vmatprep.subr.mxu0 0.0
  %715 = vmatpush1.msra.mxu0 0.0
  %716 = vmatprep.subr.mxu0 0.0
  %717 = vmatpush1.msra.mxu0 0.0
  %718 = vmatprep.subr.mxu0 0.0
  %719 = vmatpush1.msra.mxu0 0.0
  %720 = vmatprep.subr.mxu0 0.0
  %721 = vmatpush1.msra.mxu0 0.0
  %722 = vmatprep.subr.mxu0 0.0
  %723 = vmatpush1.msra.mxu0 0.0
  %724 = vmatprep.subr.mxu0 0.0
  %725 = vmatpush1.msra.mxu0 0.0
  %726 = vmatprep.subr.mxu0 0.0
  %727 = vmatpush1.msra.mxu0 0.0
  %728 = vmatprep.subr.mxu0 0.0
  %729 = vmatpush1.msra.mxu0 0.0
  %730 = vmatprep.subr.mxu0 0.0
  %731 = vmatpush1.msra.mxu0 0.0
  %732 = vmatprep.subr.mxu0 0.0
  %733 = vmatpush1.msra.mxu0 0.0
  %734 = vmatprep.subr.mxu0 0.0
  %735 = vmatpush1.msra.mxu0 0.0
  %736 = vmatprep.subr.mxu0 0.0
  %737 = vmatpush1.msra.mxu0 0.0
  %738 = vmatprep.subr.mxu0 0.0
  %739 = vmatpush1.msra.mxu0 0.0
  %740 = vmatprep.subr.mxu0 0.0
  %741 = vmatpush1.msra.mxu0 0.0
  %742 = vmatprep.subr.mxu0 0.0
  %743 = vmatpush1.msra.mxu0 0.0
  %744 = vmatprep.subr.mxu0 0.0
  %745 = vmatpush1.msra.mxu0 0.0
  %746 = vmatprep.subr.mxu0 0.0
  %747 = vmatpush1.msra.mxu0 0.0
  %748 = vmatprep.mubr.f32.mxu0 0.0
  %749 = vmatmul.mubr.f32.gmra.mrb[0].mxu0 %v682
  %v750 = vpop.f32.mrb[0].mxu0
  %v751 = vadd.f32 0.0, %v750
  %v752 = vpop.f32.mrb[0].mxu0
  %753 = vdwg.mxu0
  %v755 = vrot.slane %v751, 2
  %v757 = vadd.f32 %v358, %v755
  %v758 = vxor.u32 %v757, 2147483648
  %v759 = vmul.f32 %v758, 1.442695
  %v760 = vpow.pop %v759
  %v761 = vadd.f32 %v760, 1.0
  %v762 = vrcp.pop %v761
  %v763 = vmul.f32 1.0, %v762
  %v764 = vtanh.pop %v757
  %v766 = vrot.slane %v671, 6
  %v768 = vmul.f32 %v763, %v766
  %770 = vrot.lane.b32.xlu0 %v764, 64
  %v771 = vpop.permute.xlu0 %770
  %v773 = vmul.f32 %v763, %v771
  %775 = vrot.lane.b32.xlu0 %v773, 32
  %v776 = vpop.permute.xlu0 %775
  %v778 = vadd.f32 %v768, %v776
  %v779 = vtanh.pop %v778
  %781 = vrot.lane.b32.xlu0 %v779, 64
  %v782 = vpop.permute.xlu0 %781
  %v784 = vmul.f32 %v763, %v782
  %v786 = vrot.slane %v784, 6
  %787 = vrot.lane.b32.xlu0 %v786, 32
  %v788 = vpop.permute.xlu0 %787
  %v789 = vsel %vm366, %v788, 0
  %791 = vmatprep.subr.mxu0 0.0
  %792 = vmatpush1.msra.mxu0 %v15
  %793 = vmatprep.subr.mxu0 0.0
  %794 = vmatpush1.msra.mxu0 %v16
  %795 = vmatprep.subr.mxu0 0.0
  %796 = vmatpush1.msra.mxu0 %v17
  %797 = vmatprep.subr.mxu0 0.0
  %798 = vmatpush1.msra.mxu0 %v18
  %799 = vmatprep.subr.mxu0 0.0
  %800 = vmatpush1.msra.mxu0 0.0
  %801 = vmatprep.subr.mxu0 0.0
  %802 = vmatpush1.msra.mxu0 0.0
  %803 = vmatprep.subr.mxu0 0.0
  %804 = vmatpush1.msra.mxu0 0.0
  %805 = vmatprep.subr.mxu0 0.0
  %806 = vmatpush1.msra.mxu0 0.0
  %807 = vmatprep.subr.mxu0 0.0
  %808 = vmatpush1.msra.mxu0 0.0
  %809 = vmatprep.subr.mxu0 0.0
  %810 = vmatpush1.msra.mxu0 0.0
  %811 = vmatprep.subr.mxu0 0.0
  %812 = vmatpush1.msra.mxu0 0.0
  %813 = vmatprep.subr.mxu0 0.0
  %814 = vmatpush1.msra.mxu0 0.0
  %815 = vmatprep.subr.mxu0 0.0
  %816 = vmatpush1.msra.mxu0 0.0
  %817 = vmatprep.subr.mxu0 0.0
  %818 = vmatpush1.msra.mxu0 0.0
  %819 = vmatprep.subr.mxu0 0.0
  %820 = vmatpush1.msra.mxu0 0.0
  %821 = vmatprep.subr.mxu0 0.0
  %822 = vmatpush1.msra.mxu0 0.0
  %823 = vmatprep.subr.mxu0 0.0
  %824 = vmatpush1.msra.mxu0 0.0
  %825 = vmatprep.subr.mxu0 0.0
  %826 = vmatpush1.msra.mxu0 0.0
  %827 = vmatprep.subr.mxu0 0.0
  %828 = vmatpush1.msra.mxu0 0.0
  %829 = vmatprep.subr.mxu0 0.0
  %830 = vmatpush1.msra.mxu0 0.0
  %831 = vmatprep.subr.mxu0 0.0
  %832 = vmatpush1.msra.mxu0 0.0
  %833 = vmatprep.subr.mxu0 0.0
  %834 = vmatpush1.msra.mxu0 0.0
  %835 = vmatprep.subr.mxu0 0.0
  %836 = vmatpush1.msra.mxu0 0.0
  %837 = vmatprep.subr.mxu0 0.0
  %838 = vmatpush1.msra.mxu0 0.0
  %839 = vmatprep.subr.mxu0 0.0
  %840 = vmatpush1.msra.mxu0 0.0
  %841 = vmatprep.subr.mxu0 0.0
  %842 = vmatpush1.msra.mxu0 0.0
  %843 = vmatprep.subr.mxu0 0.0
  %844 = vmatpush1.msra.mxu0 0.0
  %845 = vmatprep.subr.mxu0 0.0
  %846 = vmatpush1.msra.mxu0 0.0
  %847 = vmatprep.subr.mxu0 0.0
  %848 = vmatpush1.msra.mxu0 0.0
  %849 = vmatprep.subr.mxu0 0.0
  %850 = vmatpush1.msra.mxu0 0.0
  %851 = vmatprep.subr.mxu0 0.0
  %852 = vmatpush1.msra.mxu0 0.0
  %853 = vmatprep.subr.mxu0 0.0
  %854 = vmatpush1.msra.mxu0 0.0
  %855 = vmatprep.mubr.f32.mxu0 0.0
  %856 = vmatmul.mubr.f32.gmra.mrb[0].mxu0 %v789
  %v857 = vpop.f32.mrb[0].mxu0
  %v858 = vadd.f32 0.0, %v857
  %v859 = vpop.f32.mrb[0].mxu0
  %860 = vdwg.mxu0
  %v861 = vadd.f32 %v363, %v858
  %v862 = vxor.u32 %v861, 2147483648
  %v863 = vmul.f32 %v862, 1.442695
  %v864 = vpow.pop %v863
  %v865 = vadd.f32 %v864, 1.0
  %v866 = vrcp.pop %v865
  %v867 = vmul.f32 1.0, %v866
  %v868 = vtanh.pop %v861
  %v870 = vrot.slane %v778, 6
  %v872 = vmul.f32 %v867, %v870
  %874 = vrot.lane.b32.xlu0 %v868, 64
  %v875 = vpop.permute.xlu0 %874
  %v877 = vmul.f32 %v867, %v875
  %879 = vrot.lane.b32.xlu0 %v877, 32
  %v880 = vpop.permute.xlu0 %879
  %v882 = vadd.f32 %v872, %v880
  %v883 = vtanh.pop %v882
  %885 = vrot.lane.b32.xlu0 %v883, 64
  %v886 = vpop.permute.xlu0 %885
  %v888 = vmul.f32 %v867, %v886
  %890 = vrot.lane.b32.xlu0 %v888, 32
  %v891 = vpop.permute.xlu0 %890
  %v892 = vsel %vm366, %v891, 0
  %894 = vmatprep.subr.mxu0 0.0
  %895 = vmatpush1.msra.mxu0 %v15
  %896 = vmatprep.subr.mxu0 0.0
  %897 = vmatpush1.msra.mxu0 %v16
  %898 = vmatprep.subr.mxu0 0.0
  %899 = vmatpush1.msra.mxu0 %v17
  %900 = vmatprep.subr.mxu0 0.0
  %901 = vmatpush1.msra.mxu0 %v18
  %902 = vmatprep.subr.mxu0 0.0
  %903 = vmatpush1.msra.mxu0 0.0
  %904 = vmatprep.subr.mxu0 0.0
  %905 = vmatpush1.msra.mxu0 0.0
  %906 = vmatprep.subr.mxu0 0.0
  %907 = vmatpush1.msra.mxu0 0.0
  %908 = vmatprep.subr.mxu0 0.0
  %909 = vmatpush1.msra.mxu0 0.0
  %910 = vmatprep.subr.mxu0 0.0
  %911 = vmatpush1.msra.mxu0 0.0
  %912 = vmatprep.subr.mxu0 0.0
  %913 = vmatpush1.msra.mxu0 0.0
  %914 = vmatprep.subr.mxu0 0.0
  %915 = vmatpush1.msra.mxu0 0.0
  %916 = vmatprep.subr.mxu0 0.0
  %917 = vmatpush1.msra.mxu0 0.0
  %918 = vmatprep.subr.mxu0 0.0
  %919 = vmatpush1.msra.mxu0 0.0
  %920 = vmatprep.subr.mxu0 0.0
  %921 = vmatpush1.msra.mxu0 0.0
  %922 = vmatprep.subr.mxu0 0.0
  %923 = vmatpush1.msra.mxu0 0.0
  %924 = vmatprep.subr.mxu0 0.0
  %925 = vmatpush1.msra.mxu0 0.0
  %926 = vmatprep.subr.mxu0 0.0
  %927 = vmatpush1.msra.mxu0 0.0
  %928 = vmatprep.subr.mxu0 0.0
  %929 = vmatpush1.msra.mxu0 0.0
  %930 = vmatprep.subr.mxu0 0.0
  %931 = vmatpush1.msra.mxu0 0.0
  %932 = vmatprep.subr.mxu0 0.0
  %933 = vmatpush1.msra.mxu0 0.0
  %934 = vmatprep.subr.mxu0 0.0
  %935 = vmatpush1.msra.mxu0 0.0
  %936 = vmatprep.subr.mxu0 0.0
  %937 = vmatpush1.msra.mxu0 0.0
  %938 = vmatprep.subr.mxu0 0.0
  %939 = vmatpush1.msra.mxu0 0.0
  %940 = vmatprep.subr.mxu0 0.0
  %941 = vmatpush1.msra.mxu0 0.0
  %942 = vmatprep.subr.mxu0 0.0
  %943 = vmatpush1.msra.mxu0 0.0
  %944 = vmatprep.subr.mxu0 0.0
  %945 = vmatpush1.msra.mxu0 0.0
  %946 = vmatprep.subr.mxu0 0.0
  %947 = vmatpush1.msra.mxu0 0.0
  %948 = vmatprep.subr.mxu0 0.0
  %949 = vmatpush1.msra.mxu0 0.0
  %950 = vmatprep.subr.mxu0 0.0
  %951 = vmatpush1.msra.mxu0 0.0
  %952 = vmatprep.subr.mxu0 0.0
  %953 = vmatpush1.msra.mxu0 0.0
  %954 = vmatprep.subr.mxu0 0.0
  %955 = vmatpush1.msra.mxu0 0.0
  %956 = vmatprep.subr.mxu0 0.0
  %957 = vmatpush1.msra.mxu0 0.0
  %958 = vmatprep.mubr.f32.mxu0 0.0
  %959 = vmatmul.mubr.f32.gmra.mrb[0].mxu0 %v892
  %v960 = vpop.f32.mrb[0].mxu0
  %v961 = vadd.f32 0.0, %v960
  %v962 = vpop.f32.mrb[0].mxu0
  %963 = vdwg.mxu0
  %v965 = vrot.slane %v961, 6
  %v967 = vadd.f32 %v363, %v965
  %v968 = vxor.u32 %v967, 2147483648
  %v969 = vmul.f32 %v968, 1.442695
  %v970 = vpow.pop %v969
  %v971 = vadd.f32 %v970, 1.0
  %v972 = vrcp.pop %v971
  %v973 = vmul.f32 1.0, %v972
  %v974 = vtanh.pop %v967
  %v976 = vrot.slane %v882, 6
  %v978 = vmul.f32 %v973, %v976
  %980 = vrot.lane.b32.xlu0 %v974, 64
  %v981 = vpop.permute.xlu0 %980
  %v983 = vmul.f32 %v973, %v981
  %985 = vrot.lane.b32.xlu0 %v983, 32
  %v986 = vpop.permute.xlu0 %985
  %v988 = vadd.f32 %v978, %v986
  %v989 = vtanh.pop %v988
  %991 = vrot.lane.b32.xlu0 %v989, 64
  %v992 = vpop.permute.xlu0 %991
  %v994 = vmul.f32 %v973, %v992
  %v996 = vrot.slane %v994, 2
  %997 = vrot.lane.b32.xlu0 %v996, 32
  %v998 = vpop.permute.xlu0 %997
  %v999 = vsel %vm366, %v998, 0
  %1001 = vmatprep.subr.mxu0 0.0
  %1002 = vmatpush1.msra.mxu0 %v15
  %1003 = vmatprep.subr.mxu0 0.0
  %1004 = vmatpush1.msra.mxu0 %v16
  %1005 = vmatprep.subr.mxu0 0.0
  %1006 = vmatpush1.msra.mxu0 %v17
  %1007 = vmatprep.subr.mxu0 0.0
  %1008 = vmatpush1.msra.mxu0 %v18
  %1009 = vmatprep.subr.mxu0 0.0
  %1010 = vmatpush1.msra.mxu0 0.0
  %1011 = vmatprep.subr.mxu0 0.0
  %1012 = vmatpush1.msra.mxu0 0.0
  %1013 = vmatprep.subr.mxu0 0.0
  %1014 = vmatpush1.msra.mxu0 0.0
  %1015 = vmatprep.subr.mxu0 0.0
  %1016 = vmatpush1.msra.mxu0 0.0
  %1017 = vmatprep.subr.mxu0 0.0
  %1018 = vmatpush1.msra.mxu0 0.0
  %1019 = vmatprep.subr.mxu0 0.0
  %1020 = vmatpush1.msra.mxu0 0.0
  %1021 = vmatprep.subr.mxu0 0.0
  %1022 = vmatpush1.msra.mxu0 0.0
  %1023 = vmatprep.subr.mxu0 0.0
  %1024 = vmatpush1.msra.mxu0 0.0
  %1025 = vmatprep.subr.mxu0 0.0
  %1026 = vmatpush1.msra.mxu0 0.0
  %1027 = vmatprep.subr.mxu0 0.0
  %1028 = vmatpush1.msra.mxu0 0.0
  %1029 = vmatprep.subr.mxu0 0.0
  %1030 = vmatpush1.msra.mxu0 0.0
  %1031 = vmatprep.subr.mxu0 0.0
  %1032 = vmatpush1.msra.mxu0 0.0
  %1033 = vmatprep.subr.mxu0 0.0
  %1034 = vmatpush1.msra.mxu0 0.0
  %1035 = vmatprep.subr.mxu0 0.0
  %1036 = vmatpush1.msra.mxu0 0.0
  %1037 = vmatprep.subr.mxu0 0.0
  %1038 = vmatpush1.msra.mxu0 0.0
  %1039 = vmatprep.subr.mxu0 0.0
  %1040 = vmatpush1.msra.mxu0 0.0
  %1041 = vmatprep.subr.mxu0 0.0
  %1042 = vmatpush1.msra.mxu0 0.0
  %1043 = vmatprep.subr.mxu0 0.0
  %1044 = vmatpush1.msra.mxu0 0.0
  %1045 = vmatprep.subr.mxu0 0.0
  %1046 = vmatpush1.msra.mxu0 0.0
  %1047 = vmatprep.subr.mxu0 0.0
  %1048 = vmatpush1.msra.mxu0 0.0
  %1049 = vmatprep.subr.mxu0 0.0
  %1050 = vmatpush1.msra.mxu0 0.0
  %1051 = vmatprep.subr.mxu0 0.0
  %1052 = vmatpush1.msra.mxu0 0.0
  %1053 = vmatprep.subr.mxu0 0.0
  %1054 = vmatpush1.msra.mxu0 0.0
  %1055 = vmatprep.subr.mxu0 0.0
  %1056 = vmatpush1.msra.mxu0 0.0
  %1057 = vmatprep.subr.mxu0 0.0
  %1058 = vmatpush1.msra.mxu0 0.0
  %1059 = vmatprep.subr.mxu0 0.0
  %1060 = vmatpush1.msra.mxu0 0.0
  %1061 = vmatprep.subr.mxu0 0.0
  %1062 = vmatpush1.msra.mxu0 0.0
  %1063 = vmatprep.subr.mxu0 0.0
  %1064 = vmatpush1.msra.mxu0 0.0
  %1065 = vmatprep.mubr.f32.mxu0 0.0
  %1066 = vmatmul.mubr.f32.gmra.mrb[0].mxu0 %v999
  %v1067 = vpop.f32.mrb[0].mxu0
  %v1068 = vadd.f32 0.0, %v1067
  %v1069 = vpop.f32.mrb[0].mxu0
  %1070 = vdwg.mxu0
  %v1072 = vrot.slane %v1068, 4
  %v1074 = vadd.f32 %v363, %v1072
  %v1075 = vxor.u32 %v1074, 2147483648
  %v1076 = vmul.f32 %v1075, 1.442695
  %v1077 = vpow.pop %v1076
  %v1078 = vadd.f32 %v1077, 1.0
  %v1079 = vrcp.pop %v1078
  %v1080 = vmul.f32 1.0, %v1079
  %v1081 = vtanh.pop %v1074
  %v1083 = vrot.slane %v988, 6
  %v1085 = vmul.f32 %v1080, %v1083
  %1087 = vrot.lane.b32.xlu0 %v1081, 64
  %v1088 = vpop.permute.xlu0 %1087
  %v1090 = vmul.f32 %v1080, %v1088
  %1092 = vrot.lane.b32.xlu0 %v1090, 32
  %v1093 = vpop.permute.xlu0 %1092
  %v1095 = vadd.f32 %v1085, %v1093
  %v1096 = vtanh.pop %v1095
  %1098 = vrot.lane.b32.xlu0 %v1096, 64
  %v1099 = vpop.permute.xlu0 %1098
  %v1101 = vmul.f32 %v1080, %v1099
  %v1103 = vrot.slane %v1101, 4
  %1104 = vrot.lane.b32.xlu0 %v1103, 32
  %v1105 = vpop.permute.xlu0 %1104
  %v1106 = vsel %vm366, %v1105, 0
  %1108 = vmatprep.subr.mxu0 0.0
  %1109 = vmatpush1.msra.mxu0 %v15
  %1110 = vmatprep.subr.mxu0 0.0
  %1111 = vmatpush1.msra.mxu0 %v16
  %1112 = vmatprep.subr.mxu0 0.0
  %1113 = vmatpush1.msra.mxu0 %v17
  %1114 = vmatprep.subr.mxu0 0.0
  %1115 = vmatpush1.msra.mxu0 %v18
  %1116 = vmatprep.subr.mxu0 0.0
  %1117 = vmatpush1.msra.mxu0 0.0
  %1118 = vmatprep.subr.mxu0 0.0
  %1119 = vmatpush1.msra.mxu0 0.0
  %1120 = vmatprep.subr.mxu0 0.0
  %1121 = vmatpush1.msra.mxu0 0.0
  %1122 = vmatprep.subr.mxu0 0.0
  %1123 = vmatpush1.msra.mxu0 0.0
  %1124 = vmatprep.subr.mxu0 0.0
  %1125 = vmatpush1.msra.mxu0 0.0
  %1126 = vmatprep.subr.mxu0 0.0
  %1127 = vmatpush1.msra.mxu0 0.0
  %1128 = vmatprep.subr.mxu0 0.0
  %1129 = vmatpush1.msra.mxu0 0.0
  %1130 = vmatprep.subr.mxu0 0.0
  %1131 = vmatpush1.msra.mxu0 0.0
  %1132 = vmatprep.subr.mxu0 0.0
  %1133 = vmatpush1.msra.mxu0 0.0
  %1134 = vmatprep.subr.mxu0 0.0
  %1135 = vmatpush1.msra.mxu0 0.0
  %1136 = vmatprep.subr.mxu0 0.0
  %1137 = vmatpush1.msra.mxu0 0.0
  %1138 = vmatprep.subr.mxu0 0.0
  %1139 = vmatpush1.msra.mxu0 0.0
  %1140 = vmatprep.subr.mxu0 0.0
  %1141 = vmatpush1.msra.mxu0 0.0
  %1142 = vmatprep.subr.mxu0 0.0
  %1143 = vmatpush1.msra.mxu0 0.0
  %1144 = vmatprep.subr.mxu0 0.0
  %1145 = vmatpush1.msra.mxu0 0.0
  %1146 = vmatprep.subr.mxu0 0.0
  %1147 = vmatpush1.msra.mxu0 0.0
  %1148 = vmatprep.subr.mxu0 0.0
  %1149 = vmatpush1.msra.mxu0 0.0
  %1150 = vmatprep.subr.mxu0 0.0
  %1151 = vmatpush1.msra.mxu0 0.0
  %1152 = vmatprep.subr.mxu0 0.0
  %1153 = vmatpush1.msra.mxu0 0.0
  %1154 = vmatprep.subr.mxu0 0.0
  %1155 = vmatpush1.msra.mxu0 0.0
  %1156 = vmatprep.subr.mxu0 0.0
  %1157 = vmatpush1.msra.mxu0 0.0
  %1158 = vmatprep.subr.mxu0 0.0
  %1159 = vmatpush1.msra.mxu0 0.0
  %1160 = vmatprep.subr.mxu0 0.0
  %1161 = vmatpush1.msra.mxu0 0.0
  %1162 = vmatprep.subr.mxu0 0.0
  %1163 = vmatpush1.msra.mxu0 0.0
  %1164 = vmatprep.subr.mxu0 0.0
  %1165 = vmatpush1.msra.mxu0 0.0
  %1166 = vmatprep.subr.mxu0 0.0
  %1167 = vmatpush1.msra.mxu0 0.0
  %1168 = vmatprep.subr.mxu0 0.0
  %1169 = vmatpush1.msra.mxu0 0.0
  %1170 = vmatprep.subr.mxu0 0.0
  %1171 = vmatpush1.msra.mxu0 0.0
  %1172 = vmatprep.mubr.f32.mxu0 0.0
  %1173 = vmatmul.mubr.f32.gmra.mrb[0].mxu0 %v1106
  %v1174 = vpop.f32.mrb[0].mxu0
  %v1175 = vadd.f32 0.0, %v1174
  %v1176 = vpop.f32.mrb[0].mxu0
  %1177 = vdwg.mxu0
  %v1179 = vrot.slane %v1175, 2
  %v1181 = vadd.f32 %v363, %v1179
  %v1182 = vxor.u32 %v1181, 2147483648
  %v1183 = vmul.f32 %v1182, 1.442695
  %v1184 = vpow.pop %v1183
  %v1185 = vadd.f32 %v1184, 1.0
  %v1186 = vrcp.pop %v1185
  %v1187 = vmul.f32 1.0, %v1186
  %v1188 = vtanh.pop %v1181
  %v1190 = vrot.slane %v1095, 6
  %v1192 = vmul.f32 %v1187, %v1190
  %1194 = vrot.lane.b32.xlu0 %v1188, 64
  %v1195 = vpop.permute.xlu0 %1194
  %v1197 = vmul.f32 %v1187, %v1195
  %1199 = vrot.lane.b32.xlu0 %v1197, 32
  %v1200 = vpop.permute.xlu0 %1199
  %v1202 = vadd.f32 %v1192, %v1200
  %v1203 = vtanh.pop %v1202
  %1205 = vrot.lane.b32.xlu0 %v1203, 64
  %v1206 = vpop.permute.xlu0 %1205
  %v1208 = vmul.f32 %v1187, %v1206
  %v1209 = vsel %vm53, %v464, %v570
  %v1210 = vsel %vm43, %v1209, %v677
  %v1211 = vsel %vm33, %v1210, %v784
  %v1212 = vsel %vm53, %v888, %v994
  %v1213 = vsel %vm43, %v1212, %v1101
  %v1214 = vsel %vm33, %v1213, %v1208
  %v1215 = vlaneseq
  %v1216 = vshrl.u32 %v1215, 7
  %v1217 = vsub.s32 0, %v1216
  %v1218 = vrot.slane %v22, %v1217
  %1221 = vrot.lane.b32.xlu0 %v1211, 32
  %v1222 = vpop.permute.xlu0 %1221
  %1223 = vrot.lane.b32.xlu0 %v1214, 32
  %v1224 = vpop.permute.xlu0 %1223
  %v1225 = vsel %vm366, %v1222, 0
  %v1227 = vsel %vm366, %v1224, 0
  %1229 = vmatprep.subr.mxu0 0.0
  %1230 = vmatpush1.msra.mxu0 %v23
  %1231 = vmatprep.subr.mxu0 0.0
  %1232 = vmatpush1.msra.mxu0 %v24
  %1233 = vmatprep.subr.mxu0 0.0
  %1234 = vmatpush1.msra.mxu0 %v25
  %1235 = vmatprep.subr.mxu0 0.0
  %1236 = vmatpush1.msra.mxu0 %v26
  %1237 = vmatprep.subr.mxu0 0.0
  %1238 = vmatpush1.msra.mxu0 0.0
  %1239 = vmatprep.subr.mxu0 0.0
  %1240 = vmatpush1.msra.mxu0 0.0
  %1241 = vmatprep.subr.mxu0 0.0
  %1242 = vmatpush1.msra.mxu0 0.0
  %1243 = vmatprep.subr.mxu0 0.0
  %1244 = vmatpush1.msra.mxu0 0.0
  %1245 = vmatprep.subr.mxu0 0.0
  %1246 = vmatpush1.msra.mxu0 0.0
  %1247 = vmatprep.subr.mxu0 0.0
  %1248 = vmatpush1.msra.mxu0 0.0
  %1249 = vmatprep.subr.mxu0 0.0
  %1250 = vmatpush1.msra.mxu0 0.0
  %1251 = vmatprep.subr.mxu0 0.0
  %1252 = vmatpush1.msra.mxu0 0.0
  %1253 = vmatprep.subr.mxu0 0.0
  %1254 = vmatpush1.msra.mxu0 0.0
  %1255 = vmatprep.subr.mxu0 0.0
  %1256 = vmatpush1.msra.mxu0 0.0
  %1257 = vmatprep.subr.mxu0 0.0
  %1258 = vmatpush1.msra.mxu0 0.0
  %1259 = vmatprep.subr.mxu0 0.0
  %1260 = vmatpush1.msra.mxu0 0.0
  %1261 = vmatprep.subr.mxu0 0.0
  %1262 = vmatpush1.msra.mxu0 0.0
  %1263 = vmatprep.subr.mxu0 0.0
  %1264 = vmatpush1.msra.mxu0 0.0
  %1265 = vmatprep.subr.mxu0 0.0
  %1266 = vmatpush1.msra.mxu0 0.0
  %1267 = vmatprep.subr.mxu0 0.0
  %1268 = vmatpush1.msra.mxu0 0.0
  %1269 = vmatprep.subr.mxu0 0.0
  %1270 = vmatpush1.msra.mxu0 0.0
  %1271 = vmatprep.subr.mxu0 0.0
  %1272 = vmatpush1.msra.mxu0 0.0
  %1273 = vmatprep.subr.mxu0 0.0
  %1274 = vmatpush1.msra.mxu0 0.0
  %1275 = vmatprep.subr.mxu0 0.0
  %1276 = vmatpush1.msra.mxu0 0.0
  %1277 = vmatprep.subr.mxu0 0.0
  %1278 = vmatpush1.msra.mxu0 0.0
  %1279 = vmatprep.subr.mxu0 0.0
  %1280 = vmatpush1.msra.mxu0 0.0
  %1281 = vmatprep.subr.mxu0 0.0
  %1282 = vmatpush1.msra.mxu0 0.0
  %1283 = vmatprep.subr.mxu0 0.0
  %1284 = vmatpush1.msra.mxu0 0.0
  %1285 = vmatprep.subr.mxu0 0.0
  %1286 = vmatpush1.msra.mxu0 0.0
  %1287 = vmatprep.subr.mxu0 0.0
  %1288 = vmatpush1.msra.mxu0 0.0
  %1289 = vmatprep.subr.mxu0 0.0
  %1290 = vmatpush1.msra.mxu0 0.0
  %1291 = vmatprep.subr.mxu0 0.0
  %1292 = vmatpush1.msra.mxu0 0.0
  %1293 = vmatprep.mubr.f32.mxu0 0.0
  %1294 = vmatmul.mubr.f32.gmra.mrb[0].mxu0 %v1225
  %v1295 = vpop.f32.mrb[0].mxu0
  %v1296 = vadd.f32 %v1218, %v1295
  %v1297 = vpop.f32.mrb[0].mxu0
  %1298 = vmatprep.mubr.f32.mxu0 0.0
  %1299 = vmatmul.mubr.f32.gmra.mrb[0].mxu0 %v1227
  %v1300 = vpop.f32.mrb[0].mxu0
  %v1301 = vadd.f32 %v1218, %v1300
  %v1302 = vpop.f32.mrb[0].mxu0
  %1303 = vdwg.mxu0
  %v1304 = vadd.f32 %v270, %v1296
  %v1305 = vadd.f32 %v271, %v1301
  %v1308 = vrot.slane %v1304, 4
  %v1309 = vrot.slane %v1305, 4
  %v1310 = vsel %vm43, %v1308, %v1309
  %v1314 = vsub.f32 %v27, %v1308
  %v1315 = vsub.f32 %v28, %v1310
  %v1316 = vsub.f32 %v29, %v1309
  %v1320 = vrot.slane %v1314, 4
  %v1321 = vrot.slane %v1315, 4
  %v1322 = vsel %vm43, %v1320, %v1321
  %v1323 = vrot.slane %v1316, 4
  %v1324 = vsel %vm43, %v1321, %v1323
  %v1327 = vadd.f32 %v1304, %v1322
  %v1328 = vadd.f32 %v1305, %v1324
  %1329 = vst.msk [vmem:[%s3] sm:$0xff] %vm183, %v1327
  %1330 = vst.msk [vmem:[%s3 + $0x8] sm:$0xff] %vm183, %v1328
  // Predicated region
  $region14: #{tpu_custom_call.1} parent=0 // pred_check
    _
  $region15: #{tpu_custom_call.1} parent=0 // pred_check_branch
    %1332 = sbr.rel (0) target = $region17
  $region16: #{tpu_custom_call.1} parent=0 // pred_region
    _
  $region17: #{tpu_custom_call.1} parent=0 // pred_fallthru
    _
  // Predicated region
  $region18: #{tpu_custom_call.1} parent=0 // pred_check
    _
  $region19: #{tpu_custom_call.1} parent=0 // pred_check_branch
    %1334 = sbr.rel (0) target = $region21
  $region20: #{tpu_custom_call.1} parent=0 // pred_region
    _
  $region21: #{tpu_custom_call.1} parent=0 // pred_fallthru
    _

</llo_original>
